<compile_context>
chip_gen: v7x
topology: tpu7x:2x2x1
jax: 0.10.0
libtpu: 0.0.40
codegen_flags: <defaults>
</compile_context>

<pallas_src>
import functools

import jax
import jax.numpy as jnp
from jax.experimental import pallas as pl
from jax.experimental.pallas import tpu as pltpu


def encoder_kernel(x_ref, w1_ref, b1_ref, wh_ref, bh_ref, eps_ref, out_ref, *,
                   num_latent_padded):
    lp = num_latent_padded

    # Hidden layer: x @ W1 + b1, ReLU.  bf16 operands, f32 MXU accumulation.
    h = jnp.dot(x_ref[...], w1_ref[...], preferred_element_type=jnp.float32)
    h = jnp.maximum(h + b1_ref[...], 0.0)

    # Fused heads: one N = 2*Lp (=128, lane-dense) matmul -> [mean | log_std].
    heads = jnp.dot(h.astype(wh_ref.dtype), wh_ref[...],
                    preferred_element_type=jnp.float32) + bh_ref[...]

    # exp over the full 128-lane heads tile (EUP is otherwise idle); split at
    # lane Lp only once for the epilogue.
    exp_heads = jnp.exp(heads)
    mean = heads[:, :lp]
    std = exp_heads[:, lp:]
    z = mean + std * eps_ref[...]

    # Single full-width (4*Lp = 256 lane) store: [mean | std | z | pad].
    pad = jnp.zeros_like(mean)
    slab = jnp.concatenate([mean, std, z, pad], axis=-1)
    out_ref[...] = slab.astype(out_ref.dtype)


def _pick_tile_b(batch):
    """Generation-aware batch tile.

    v7x has 2 TensorCores per chip: keep >= 2 "parallel" batch tiles so both
    cores get work.  v5e/v6e (and CPU interpret) are single-TC: use the whole
    batch (up to 256) as one tile to fill the MXU and drop grid-step overhead.
    """
    kind = ""
    try:
        kind = jax.devices()[0].device_kind.lower()
    except Exception:
        pass
    if "v7" in kind and batch >= 256 and batch % 128 == 0:
        return 128
    tile = min(batch, 256)
    while batch % tile != 0:
        tile //= 2
    return max(tile, 1)


def encoder_forward(images, w1, b1, w_heads, b_heads, eps, *, num_latent,
                    tile_b=None):
    B, P = images.shape
    H = w1.shape[1]
    two_l = w_heads.shape[1]
    assert two_l % 2 == 0
    Lp = two_l // 2                      # lane-padded latent width
    assert num_latent <= Lp
    assert w1.shape[0] == P and b1.shape == (1, H)
    assert w_heads.shape[0] == H and b_heads.shape == (1, two_l)
    assert eps.shape == (B, Lp)

    if tile_b is None:
        tile_b = _pick_tile_b(B)
    assert B % tile_b == 0, "pad the batch to a multiple of tile_b"
    grid = (B // tile_b,)

    # Batch is tiled; weights / biases are loaded as full (resident) blocks.
    in_specs = [
        pl.BlockSpec((tile_b, P), lambda i: (i, 0)),   # images
        pl.BlockSpec((P, H),      lambda i: (0, 0)),   # W1
        pl.BlockSpec((1, H),      lambda i: (0, 0)),   # b1
        pl.BlockSpec((H, two_l),  lambda i: (0, 0)),   # [Wm | Ws]
        pl.BlockSpec((1, two_l),  lambda i: (0, 0)),   # [bm | bs]
        pl.BlockSpec((tile_b, Lp), lambda i: (i, 0)),  # eps ~ N(0, 1)
    ]
    out_specs = pl.BlockSpec((tile_b, 4 * Lp), lambda i: (i, 0))

    packed = pl.pallas_call(
        functools.partial(encoder_kernel, num_latent_padded=Lp),
        out_shape=jax.ShapeDtypeStruct((B, 4 * Lp), jnp.float32),
        grid_spec=pltpu.PrefetchScalarGridSpec(
            num_scalar_prefetch=0,
            grid=grid,
            in_specs=in_specs,
            out_specs=out_specs,
        ),
        compiler_params=pltpu.CompilerParams(
            dimension_semantics=("parallel",),     # batch tiles across cores
            vmem_limit_bytes=32 * 1024 * 1024,
        ),
    )(images, w1, b1, w_heads, b_heads, eps)

    mean = packed[:, :num_latent]
    std = packed[:, Lp:Lp + num_latent]
    z = packed[:, 2 * Lp:2 * Lp + num_latent]
    return mean, std, z


def init_linear(key, fan_in, fan_out):
    """PyTorch-style default init: U(-1/sqrt(fan_in), 1/sqrt(fan_in))."""
    kw, kb = jax.random.split(key)
    bound = 1.0 / jnp.sqrt(jnp.float32(fan_in))
    w = jax.random.uniform(kw, (fan_in, fan_out), jnp.float32, -bound, bound)
    b = jax.random.uniform(kb, (1, fan_out), jnp.float32, -bound, bound)
    return w, b


def _pad_cols(a, target):
    pad = target - a.shape[-1]
    return a if pad == 0 else jnp.pad(a, ((0, 0), (0, pad)))


if __name__ == "__main__":
    # Shapes consistent with the module: 32x32 images -> 1024 pixels,
    # hidden = 256, latent = 50 (lane-padded to 64 inside the kernel),
    # batch = 256 so the v7x path gets 2 parallel tiles of 128 rows.
    B, P, H, L = 256, 1024, 256, 50
    Lp = 64                                    # lane-padded latent width

    key = jax.random.PRNGKey(0)
    k_img, k1, k2, k3, k_eps = jax.random.split(key, 5)

    images = jax.random.uniform(k_img, (B, P), jnp.float32)   # pixel intensities
    w1_f, b1 = init_linear(k1, P, H)   # enc_hidden Linear(num_pixels, num_hidden)
    wm_f, bm = init_linear(k2, H, L)   # z_mean     Linear(num_hidden, num_latent)
    ws_f, bs = init_linear(k3, H, L)   # z_log_std  Linear(num_hidden, num_latent)

    # Lane-pad latent dim to 64 and fuse the heads: [Wm | Ws], [bm | bs].
    wm_p, ws_p = _pad_cols(wm_f, Lp), _pad_cols(ws_f, Lp)
    bm_p, bs_p = _pad_cols(bm, Lp), _pad_cols(bs, Lp)

    # bf16 weights / activations (f32 MXU accumulation).
    images_b = images.astype(jnp.bfloat16)
    w1 = w1_f.astype(jnp.bfloat16)
    w_heads = jnp.concatenate([wm_p, ws_p], axis=1).astype(jnp.bfloat16)
    b_heads = jnp.concatenate([bm_p, bs_p], axis=1)

    # Reparameterization noise drawn with jax.random (bit-reproducible).
    eps = jax.random.normal(k_eps, (B, Lp), jnp.float32)

    mean, std, z = encoder_forward(images_b, w1, b1, w_heads, b_heads, eps,
                                   num_latent=L)
    jax.block_until_ready((mean, std, z))

    # Pure-JAX reference with the same bf16 operands / f32 accumulation.
    h_ref = jnp.maximum(
        jnp.dot(images_b, w1, preferred_element_type=jnp.float32) + b1, 0.0)
    heads_ref = jnp.dot(h_ref.astype(jnp.bfloat16), w_heads,
                        preferred_element_type=jnp.float32) + b_heads
    mean_ref = heads_ref[:, :L]
    std_ref = jnp.exp(heads_ref[:, Lp:Lp + L])
    z_ref = mean_ref + std_ref * eps[:, :L]

    assert jnp.allclose(mean, mean_ref, atol=1e-2, rtol=1e-2), "mean mismatch"
    assert jnp.allclose(std, std_ref, atol=1e-2, rtol=1e-2), "std mismatch"
    assert jnp.allclose(z, z_ref, atol=1e-2, rtol=1e-2), "z mismatch"
    assert bool(jnp.all(jnp.isfinite(z))), "non-finite z"

    print("KERNEL_OK")
</pallas_src>

<mosaic_0001>
module attributes {stable_mosaic.version = 11 : i64} {
  func.func @encoder_kernel(%arg0: i32, %arg1: memref<256x1024xbf16, #tpu.memory_space<vmem>>, %arg2: memref<1024x256xbf16, #tpu.memory_space<vmem>>, %arg3: memref<1x256xf32, #tpu.memory_space<vmem>>, %arg4: memref<256x128xbf16, #tpu.memory_space<vmem>>, %arg5: memref<1x128xf32, #tpu.memory_space<vmem>>, %arg6: memref<256x64xf32, #tpu.memory_space<vmem>>, %arg7: memref<256x256xf32, #tpu.memory_space<vmem>>) attributes {dimension_semantics = [#tpu.dimension_semantics<parallel>], iteration_bounds = array<i64: 1>, scalar_prefetch = 0 : i64, scratch_operands = 0 : i64, tpu.core_type = #tpu.core_type<tc>, window_params = [{transform_indices = @transform_0, window_bounds = array<i64: 256, 1024>}, {pipeline_mode = #tpu.pipeline_mode<synchronous>, transform_indices = @transform_1, window_bounds = array<i64: 1024, 256>}, {pipeline_mode = #tpu.pipeline_mode<synchronous>, transform_indices = @transform_2, window_bounds = array<i64: 1, 256>}, {pipeline_mode = #tpu.pipeline_mode<synchronous>, transform_indices = @transform_3, window_bounds = array<i64: 256, 128>}, {pipeline_mode = #tpu.pipeline_mode<synchronous>, transform_indices = @transform_4, window_bounds = array<i64: 1, 128>}, {transform_indices = @transform_5, window_bounds = array<i64: 256, 64>}, {transform_indices = @transform_6, window_bounds = array<i64: 256, 256>}]} {
    %c0 = arith.constant 0 : index
    %c0_0 = arith.constant 0 : index
    %0 = vector.load %arg1[%c0, %c0_0] : memref<256x1024xbf16, #tpu.memory_space<vmem>>, vector<256x1024xbf16>
    %c0_1 = arith.constant 0 : index
    %c0_2 = arith.constant 0 : index
    %1 = vector.load %arg2[%c0_1, %c0_2] : memref<1024x256xbf16, #tpu.memory_space<vmem>>, vector<1024x256xbf16>
    %cst = arith.constant dense<0.000000e+00> : vector<256x256xf32>
    %2 = tpu.matmul %0, %1, %cst {dimension_numbers = #tpu.dot_dimension_numbers<[1], [0], [0], [1], [0, 0, 1, 1], [], []>} : vector<256x1024xbf16>, vector<1024x256xbf16>, vector<256x256xf32> -> vector<256x256xf32>
    %c0_3 = arith.constant 0 : index
    %c0_4 = arith.constant 0 : index
    %3 = vector.load %arg3[%c0_3, %c0_4] : memref<1x256xf32, #tpu.memory_space<vmem>>, vector<1x256xf32>
    %4 = vector.broadcast %3 : vector<1x256xf32> to vector<256x256xf32>
    %5 = arith.addf %2, %4 : vector<256x256xf32>
    %cst_5 = arith.constant 0.000000e+00 : f32
    %6 = vector.broadcast %cst_5 : f32 to vector<256x256xf32>
    %7 = arith.maximumf %5, %6 : vector<256x256xf32>
    %8 = arith.truncf %7 : vector<256x256xf32> to vector<256x256xbf16>
    %c0_6 = arith.constant 0 : index
    %c0_7 = arith.constant 0 : index
    %9 = vector.load %arg4[%c0_6, %c0_7] : memref<256x128xbf16, #tpu.memory_space<vmem>>, vector<256x128xbf16>
    %cst_8 = arith.constant dense<0.000000e+00> : vector<256x128xf32>
    %10 = tpu.matmul %8, %9, %cst_8 {dimension_numbers = #tpu.dot_dimension_numbers<[1], [0], [0], [1], [0, 0, 1, 1], [], []>} : vector<256x256xbf16>, vector<256x128xbf16>, vector<256x128xf32> -> vector<256x128xf32>
    %c0_9 = arith.constant 0 : index
    %c0_10 = arith.constant 0 : index
    %11 = vector.load %arg5[%c0_9, %c0_10] : memref<1x128xf32, #tpu.memory_space<vmem>>, vector<1x128xf32>
    %12 = vector.broadcast %11 : vector<1x128xf32> to vector<256x128xf32>
    %13 = arith.addf %10, %12 : vector<256x128xf32>
    %14 = math.exp %13 : vector<256x128xf32>
    %15 = vector.extract_strided_slice %13 {offsets = [0, 0], sizes = [256, 64], strides = [1, 1]} : vector<256x128xf32> to vector<256x64xf32>
    %16 = vector.extract_strided_slice %14 {offsets = [0, 64], sizes = [256, 64], strides = [1, 1]} : vector<256x128xf32> to vector<256x64xf32>
    %c0_11 = arith.constant 0 : index
    %c0_12 = arith.constant 0 : index
    %17 = vector.load %arg6[%c0_11, %c0_12] : memref<256x64xf32, #tpu.memory_space<vmem>>, vector<256x64xf32>
    %18 = arith.mulf %16, %17 : vector<256x64xf32>
    %19 = arith.addf %15, %18 : vector<256x64xf32>
    %cst_13 = arith.constant 0.000000e+00 : f32
    %20 = vector.broadcast %cst_13 : f32 to vector<256x64xf32>
    %21 = tpu.concatenate %15, %16, %19, %20 in 1 : vector<256x64xf32>, vector<256x64xf32>, vector<256x64xf32>, vector<256x64xf32> -> vector<256x256xf32>
    %c0_14 = arith.constant 0 : index
    %c0_15 = arith.constant 0 : index
    %22 = vector.load %arg7[%c0_14, %c0_15] : memref<256x256xf32, #tpu.memory_space<vmem>>, vector<256x256xf32>
    tpu.vector_store %arg7[%c0_14, %c0_15], %21 {strides = array<i32>} : memref<256x256xf32, #tpu.memory_space<vmem>>, vector<256x256xf32>,
    return
  }
  func.func @transform_0(%arg0: i32) -> (i32, i32) {
    %c0_i32 = arith.constant 0 : i32
    %c0_i32_0 = arith.constant 0 : i32
    return %arg0, %c0_i32 : i32, i32
  }
  func.func @transform_1(%arg0: i32) -> (i32, i32) {
    %c0_i32 = arith.constant 0 : i32
    %c0_i32_0 = arith.constant 0 : i32
    %c0_i32_1 = arith.constant 0 : i32
    return %c0_i32, %c0_i32_0 : i32, i32
  }
  func.func @transform_2(%arg0: i32) -> (i32, i32) {
    %c0_i32 = arith.constant 0 : i32
    %c0_i32_0 = arith.constant 0 : i32
    %c0_i32_1 = arith.constant 0 : i32
    return %c0_i32, %c0_i32_0 : i32, i32
  }
  func.func @transform_3(%arg0: i32) -> (i32, i32) {
    %c0_i32 = arith.constant 0 : i32
    %c0_i32_0 = arith.constant 0 : i32
    %c0_i32_1 = arith.constant 0 : i32
    return %c0_i32, %c0_i32_0 : i32, i32
  }
  func.func @transform_4(%arg0: i32) -> (i32, i32) {
    %c0_i32 = arith.constant 0 : i32
    %c0_i32_0 = arith.constant 0 : i32
    %c0_i32_1 = arith.constant 0 : i32
    return %c0_i32, %c0_i32_0 : i32, i32
  }
  func.func @transform_5(%arg0: i32) -> (i32, i32) {
    %c0_i32 = arith.constant 0 : i32
    %c0_i32_0 = arith.constant 0 : i32
    return %arg0, %c0_i32 : i32, i32
  }
  func.func @transform_6(%arg0: i32) -> (i32, i32) {
    %c0_i32 = arith.constant 0 : i32
    %c0_i32_0 = arith.constant 0 : i32
    return %arg0, %c0_i32 : i32, i32
  }
}

</mosaic_0001>

<llo_original>
// kernel: tpu_custom_call.1
$region0: #{tpu_custom_call.1}
  #allocation0 [shape = 'u32[]', space=smem, size = 0x4, offset = 0x4, fixed_abs, tag = 'smem constant byte address 0x4 - core index']
  #allocation1 [shape = 'u32[144,128]{1,0:T(1,128)}', space=vmem, size = 0x12000, scoped, tag = 'internal scratch']
  %s0 = inlined_call_operand.hbm [shape: bf16[256,1024], index: 0, kind: input, shape index: {}]
  %s1 = inlined_call_operand.hbm [shape: bf16[1024,256], index: 1, kind: input, shape index: {}]
  %s2 = inlined_call_operand.vmem [shape: f32[1,256], index: 2, kind: input, shape index: {}]
  %s3 = inlined_call_operand.vmem [shape: bf16[256,128], index: 3, kind: input, shape index: {}]
  %s4 = inlined_call_operand.vmem [shape: f32[1,128], index: 4, kind: input, shape index: {}]
  %s5 = inlined_call_operand.vmem [shape: f32[256,64], index: 5, kind: input, shape index: {}]
  %s6 = inlined_call_operand.hbm [shape: f32[256,256], index: 6, kind: output, shape index: {}]
  %s7 = sld [smem:[#allocation0]]
  $region42: #{tpu_custom_call.1} parent=0
    _
  %s9 = ssub.s32 1, %s7
  %s10 = scalar_select 0, %s9, %s7
  $region1: #{tpu_custom_call.1} parent=0
    #allocation2 [shape = 'u8[524288]{0}', space=vmem, size = 0x80000, scoped, tag = 'input window, operand 0, single buffered']
    #allocation3 [shape = 's32[1]{0}', space=sflag, size = 0x4, scoped, tag = 'scoped memory for tpu_custom_call.1']
    #allocation4 [shape = 's32[1]{0}', space=sflag, size = 0x4, scoped, tag = 'scoped memory for tpu_custom_call.1']
    #allocation5 [shape = 'u8[524288]{0}', space=vmem, size = 0x80000, scoped, tag = 'input window, operand 1, single buffered']
    #allocation6 [shape = 's32[1]{0}', space=sflag, size = 0x4, scoped, tag = 'scoped memory for tpu_custom_call.1']
    #allocation7 [shape = 'u8[262144]{0}', space=vmem, size = 0x40000, scoped, tag = 'output window, operand 0, single buffered']
    %11 = vsyncpa [#allocation3], 0
    %12 = vsyncpa [#allocation6], 0
    %13 = vsyncpa [#allocation4], 0
    // Predicated region
    $region2: #{tpu_custom_call.1} parent=1 // pred_check
      _
    $region3: #{tpu_custom_call.1} parent=1 // pred_check_branch
      %15 = sbr.rel (0) target = $region5
    $region4: #{tpu_custom_call.1} parent=1 // pred_region
      %s17 = ssub.s32 16384, 16384
      %18 = vsyncadd [#allocation3], %s17
      %s19 = sshll.u32 [#allocation2], 4
      %s20 = int_to_ptr.vmem [resolvable:$true] %s19
      %25 = dma.hbm_to_vmem [thread:$0]  %s0, 16384, %s20, [#allocation3], 512, 512, 32
    $region5: #{tpu_custom_call.1} parent=1 // pred_fallthru
      _
    // Predicated region
    $region6: #{tpu_custom_call.1} parent=1 // pred_check
      _
    $region7: #{tpu_custom_call.1} parent=1 // pred_check_branch
      %27 = sbr.rel (0) target = $region9
    $region8: #{tpu_custom_call.1} parent=1 // pred_region
      %s29 = ssub.s32 16384, 16384
      %30 = vsyncadd [#allocation6], %s29
      %s31 = sshll.u32 [#allocation5], 4
      %s32 = int_to_ptr.vmem [resolvable:$true] %s31
      %37 = dma.hbm_to_vmem [thread:$0]  %s1, 16384, %s32, [#allocation6], 128, 128, 8
    $region9: #{tpu_custom_call.1} parent=1 // pred_fallthru
      _
    // Predicated region
    $region10: #{tpu_custom_call.1} parent=1 // pred_check
      _
    $region11: #{tpu_custom_call.1} parent=1 // pred_check_branch
      %39 = sbr.rel (0) target = $region13
    $region12: #{tpu_custom_call.1} parent=1 // pred_region
      _
    $region13: #{tpu_custom_call.1} parent=1 // pred_fallthru
      _
    // Predicated region
    $region14: #{tpu_custom_call.1} parent=1 // pred_check
      _
    $region15: #{tpu_custom_call.1} parent=1 // pred_check_branch
      %41 = sbr.rel (0) target = $region17
    $region16: #{tpu_custom_call.1} parent=1 // pred_region
      _
    $region17: #{tpu_custom_call.1} parent=1 // pred_fallthru
      _
    // Predicated region
    $region18: #{tpu_custom_call.1} parent=1 // pred_check
      _
    $region19: #{tpu_custom_call.1} parent=1 // pred_check_branch
      %43 = sbr.rel (0) target = $region21
    $region20: #{tpu_custom_call.1} parent=1 // pred_region
      _
    $region21: #{tpu_custom_call.1} parent=1 // pred_fallthru
      _
    // Predicated region
    $region22: #{tpu_custom_call.1} parent=1 // pred_check
      _
    $region23: #{tpu_custom_call.1} parent=1 // pred_check_branch
      %45 = sbr.rel (0) target = $region25
    $region24: #{tpu_custom_call.1} parent=1 // pred_region
      _
    $region25: #{tpu_custom_call.1} parent=1 // pred_fallthru
      _
    // Predicated region
    $region26: #{tpu_custom_call.1} parent=1 // pred_check
      _
    $region27: #{tpu_custom_call.1} parent=1 // pred_check_branch
      %47 = sbr.rel (0) target = $region29
    $region28: #{tpu_custom_call.1} parent=1 // pred_region
      %48 = dma.done [#allocation3], 16384
    $region29: #{tpu_custom_call.1} parent=1 // pred_fallthru
      _
    // Predicated region
    $region30: #{tpu_custom_call.1} parent=1 // pred_check
      _
    $region31: #{tpu_custom_call.1} parent=1 // pred_check_branch
      %50 = sbr.rel (0) target = $region33
    $region32: #{tpu_custom_call.1} parent=1 // pred_region
      %51 = dma.done [#allocation6], 16384
    $region33: #{tpu_custom_call.1} parent=1 // pred_fallthru
      _
    %v53 = vld [vmem:[#allocation2] sm:$0xff]
    %v54 = vld [vmem:[#allocation2 + $0x8] sm:$0xff]
    %v55 = vld [vmem:[#allocation2 + $0x10] sm:$0xff]
    %v56 = vld [vmem:[#allocation2 + $0x18] sm:$0xff]
    %v57 = vld [vmem:[#allocation2 + $0x20] sm:$0xff]
    %v58 = vld [vmem:[#allocation2 + $0x28] sm:$0xff]
    %v59 = vld [vmem:[#allocation2 + $0x30] sm:$0xff]
    %v60 = vld [vmem:[#allocation2 + $0x38] sm:$0xff]
    %v61 = vld [vmem:[#allocation2 + $0x40] sm:$0xff]
    %v62 = vld [vmem:[#allocation2 + $0x48] sm:$0xff]
    %v63 = vld [vmem:[#allocation2 + $0x50] sm:$0xff]
    %v64 = vld [vmem:[#allocation2 + $0x58] sm:$0xff]
    %v65 = vld [vmem:[#allocation2 + $0x60] sm:$0xff]
    %v66 = vld [vmem:[#allocation2 + $0x68] sm:$0xff]
    %v67 = vld [vmem:[#allocation2 + $0x70] sm:$0xff]
    %v68 = vld [vmem:[#allocation2 + $0x78] sm:$0xff]
    %v69 = vld [vmem:[#allocation2 + $0x80] sm:$0xff]
    %v70 = vld [vmem:[#allocation2 + $0x88] sm:$0xff]
    %v71 = vld [vmem:[#allocation2 + $0x90] sm:$0xff]
    %v72 = vld [vmem:[#allocation2 + $0x98] sm:$0xff]
    %v73 = vld [vmem:[#allocation2 + $0xa0] sm:$0xff]
    %v74 = vld [vmem:[#allocation2 + $0xa8] sm:$0xff]
    %v75 = vld [vmem:[#allocation2 + $0xb0] sm:$0xff]
    %v76 = vld [vmem:[#allocation2 + $0xb8] sm:$0xff]
    %v77 = vld [vmem:[#allocation2 + $0xc0] sm:$0xff]
    %v78 = vld [vmem:[#allocation2 + $0xc8] sm:$0xff]
    %v79 = vld [vmem:[#allocation2 + $0xd0] sm:$0xff]
    %v80 = vld [vmem:[#allocation2 + $0xd8] sm:$0xff]
    %v81 = vld [vmem:[#allocation2 + $0xe0] sm:$0xff]
    %v82 = vld [vmem:[#allocation2 + $0xe8] sm:$0xff]
    %v83 = vld [vmem:[#allocation2 + $0xf0] sm:$0xff]
    %v84 = vld [vmem:[#allocation2 + $0xf8] sm:$0xff]
    %v85 = vld [vmem:[#allocation2 + $0x100] sm:$0xff]
    %v86 = vld [vmem:[#allocation2 + $0x108] sm:$0xff]
    %v87 = vld [vmem:[#allocation2 + $0x110] sm:$0xff]
    %v88 = vld [vmem:[#allocation2 + $0x118] sm:$0xff]
    %v89 = vld [vmem:[#allocation2 + $0x120] sm:$0xff]
    %v90 = vld [vmem:[#allocation2 + $0x128] sm:$0xff]
    %v91 = vld [vmem:[#allocation2 + $0x130] sm:$0xff]
    %v92 = vld [vmem:[#allocation2 + $0x138] sm:$0xff]
    %v93 = vld [vmem:[#allocation2 + $0x140] sm:$0xff]
    %v94 = vld [vmem:[#allocation2 + $0x148] sm:$0xff]
    %v95 = vld [vmem:[#allocation2 + $0x150] sm:$0xff]
    %v96 = vld [vmem:[#allocation2 + $0x158] sm:$0xff]
    %v97 = vld [vmem:[#allocation2 + $0x160] sm:$0xff]
    %v98 = vld [vmem:[#allocation2 + $0x168] sm:$0xff]
    %v99 = vld [vmem:[#allocation2 + $0x170] sm:$0xff]
    %v100 = vld [vmem:[#allocation2 + $0x178] sm:$0xff]
    %v101 = vld [vmem:[#allocation2 + $0x180] sm:$0xff]
    %v102 = vld [vmem:[#allocation2 + $0x188] sm:$0xff]
    %v103 = vld [vmem:[#allocation2 + $0x190] sm:$0xff]
    %v104 = vld [vmem:[#allocation2 + $0x198] sm:$0xff]
    %v105 = vld [vmem:[#allocation2 + $0x1a0] sm:$0xff]
    %v106 = vld [vmem:[#allocation2 + $0x1a8] sm:$0xff]
    %v107 = vld [vmem:[#allocation2 + $0x1b0] sm:$0xff]
    %v108 = vld [vmem:[#allocation2 + $0x1b8] sm:$0xff]
    %v109 = vld [vmem:[#allocation2 + $0x1c0] sm:$0xff]
    %v110 = vld [vmem:[#allocation2 + $0x1c8] sm:$0xff]
    %v111 = vld [vmem:[#allocation2 + $0x1d0] sm:$0xff]
    %v112 = vld [vmem:[#allocation2 + $0x1d8] sm:$0xff]
    %v113 = vld [vmem:[#allocation2 + $0x1e0] sm:$0xff]
    %v114 = vld [vmem:[#allocation2 + $0x1e8] sm:$0xff]
    %v115 = vld [vmem:[#allocation2 + $0x1f0] sm:$0xff]
    %v116 = vld [vmem:[#allocation2 + $0x1f8] sm:$0xff]
    %v117 = vld [vmem:[#allocation2 + $0x200] sm:$0xff]
    %v118 = vld [vmem:[#allocation2 + $0x208] sm:$0xff]
    %v119 = vld [vmem:[#allocation2 + $0x210] sm:$0xff]
    %v120 = vld [vmem:[#allocation2 + $0x218] sm:$0xff]
    %v121 = vld [vmem:[#allocation2 + $0x220] sm:$0xff]
    %v122 = vld [vmem:[#allocation2 + $0x228] sm:$0xff]
    %v123 = vld [vmem:[#allocation2 + $0x230] sm:$0xff]
    %v124 = vld [vmem:[#allocation2 + $0x238] sm:$0xff]
    %v125 = vld [vmem:[#allocation2 + $0x240] sm:$0xff]
    %v126 = vld [vmem:[#allocation2 + $0x248] sm:$0xff]
    %v127 = vld [vmem:[#allocation2 + $0x250] sm:$0xff]
    %v128 = vld [vmem:[#allocation2 + $0x258] sm:$0xff]
    %v129 = vld [vmem:[#allocation2 + $0x260] sm:$0xff]
    %v130 = vld [vmem:[#allocation2 + $0x268] sm:$0xff]
    %v131 = vld [vmem:[#allocation2 + $0x270] sm:$0xff]
    %v132 = vld [vmem:[#allocation2 + $0x278] sm:$0xff]
    %v133 = vld [vmem:[#allocation2 + $0x280] sm:$0xff]
    %v134 = vld [vmem:[#allocation2 + $0x288] sm:$0xff]
    %v135 = vld [vmem:[#allocation2 + $0x290] sm:$0xff]
    %v136 = vld [vmem:[#allocation2 + $0x298] sm:$0xff]
    %v137 = vld [vmem:[#allocation2 + $0x2a0] sm:$0xff]
    %v138 = vld [vmem:[#allocation2 + $0x2a8] sm:$0xff]
    %v139 = vld [vmem:[#allocation2 + $0x2b0] sm:$0xff]
    %v140 = vld [vmem:[#allocation2 + $0x2b8] sm:$0xff]
    %v141 = vld [vmem:[#allocation2 + $0x2c0] sm:$0xff]
    %v142 = vld [vmem:[#allocation2 + $0x2c8] sm:$0xff]
    %v143 = vld [vmem:[#allocation2 + $0x2d0] sm:$0xff]
    %v144 = vld [vmem:[#allocation2 + $0x2d8] sm:$0xff]
    %v145 = vld [vmem:[#allocation2 + $0x2e0] sm:$0xff]
    %v146 = vld [vmem:[#allocation2 + $0x2e8] sm:$0xff]
    %v147 = vld [vmem:[#allocation2 + $0x2f0] sm:$0xff]
    %v148 = vld [vmem:[#allocation2 + $0x2f8] sm:$0xff]
    %v149 = vld [vmem:[#allocation2 + $0x300] sm:$0xff]
    %v150 = vld [vmem:[#allocation2 + $0x308] sm:$0xff]
    %v151 = vld [vmem:[#allocation2 + $0x310] sm:$0xff]
    %v152 = vld [vmem:[#allocation2 + $0x318] sm:$0xff]
    %v153 = vld [vmem:[#allocation2 + $0x320] sm:$0xff]
    %v154 = vld [vmem:[#allocation2 + $0x328] sm:$0xff]
    %v155 = vld [vmem:[#allocation2 + $0x330] sm:$0xff]
    %v156 = vld [vmem:[#allocation2 + $0x338] sm:$0xff]
    %v157 = vld [vmem:[#allocation2 + $0x340] sm:$0xff]
    %v158 = vld [vmem:[#allocation2 + $0x348] sm:$0xff]
    %v159 = vld [vmem:[#allocation2 + $0x350] sm:$0xff]
    %v160 = vld [vmem:[#allocation2 + $0x358] sm:$0xff]
    %v161 = vld [vmem:[#allocation2 + $0x360] sm:$0xff]
    %v162 = vld [vmem:[#allocation2 + $0x368] sm:$0xff]
    %v163 = vld [vmem:[#allocation2 + $0x370] sm:$0xff]
    %v164 = vld [vmem:[#allocation2 + $0x378] sm:$0xff]
    %v165 = vld [vmem:[#allocation2 + $0x380] sm:$0xff]
    %v166 = vld [vmem:[#allocation2 + $0x388] sm:$0xff]
    %v167 = vld [vmem:[#allocation2 + $0x390] sm:$0xff]
    %v168 = vld [vmem:[#allocation2 + $0x398] sm:$0xff]
    %v169 = vld [vmem:[#allocation2 + $0x3a0] sm:$0xff]
    %v170 = vld [vmem:[#allocation2 + $0x3a8] sm:$0xff]
    %v171 = vld [vmem:[#allocation2 + $0x3b0] sm:$0xff]
    %v172 = vld [vmem:[#allocation2 + $0x3b8] sm:$0xff]
    %v173 = vld [vmem:[#allocation2 + $0x3c0] sm:$0xff]
    %v174 = vld [vmem:[#allocation2 + $0x3c8] sm:$0xff]
    %v175 = vld [vmem:[#allocation2 + $0x3d0] sm:$0xff]
    %v176 = vld [vmem:[#allocation2 + $0x3d8] sm:$0xff]
    %v177 = vld [vmem:[#allocation2 + $0x3e0] sm:$0xff]
    %v178 = vld [vmem:[#allocation2 + $0x3e8] sm:$0xff]
    %v179 = vld [vmem:[#allocation2 + $0x3f0] sm:$0xff]
    %v180 = vld [vmem:[#allocation2 + $0x3f8] sm:$0xff]
    %v181 = vld [vmem:[#allocation5] sm:$0xff]
    %v182 = vld [vmem:[#allocation5 + $0x8] sm:$0xff]
    %v183 = vld [vmem:[#allocation5 + $0x10] sm:$0xff]
    %v184 = vld [vmem:[#allocation5 + $0x18] sm:$0xff]
    %v185 = vld [vmem:[#allocation5 + $0x20] sm:$0xff]
    %v186 = vld [vmem:[#allocation5 + $0x28] sm:$0xff]
    %v187 = vld [vmem:[#allocation5 + $0x30] sm:$0xff]
    %v188 = vld [vmem:[#allocation5 + $0x38] sm:$0xff]
    %v189 = vld [vmem:[#allocation5 + $0x40] sm:$0xff]
    %v190 = vld [vmem:[#allocation5 + $0x48] sm:$0xff]
    %v191 = vld [vmem:[#allocation5 + $0x50] sm:$0xff]
    %v192 = vld [vmem:[#allocation5 + $0x58] sm:$0xff]
    %v193 = vld [vmem:[#allocation5 + $0x60] sm:$0xff]
    %v194 = vld [vmem:[#allocation5 + $0x68] sm:$0xff]
    %v195 = vld [vmem:[#allocation5 + $0x70] sm:$0xff]
    %v196 = vld [vmem:[#allocation5 + $0x78] sm:$0xff]
    %v197 = vld [vmem:[#allocation5 + $0x80] sm:$0xff]
    %v198 = vld [vmem:[#allocation5 + $0x88] sm:$0xff]
    %v199 = vld [vmem:[#allocation5 + $0x90] sm:$0xff]
    %v200 = vld [vmem:[#allocation5 + $0x98] sm:$0xff]
    %v201 = vld [vmem:[#allocation5 + $0xa0] sm:$0xff]
    %v202 = vld [vmem:[#allocation5 + $0xa8] sm:$0xff]
    %v203 = vld [vmem:[#allocation5 + $0xb0] sm:$0xff]
    %v204 = vld [vmem:[#allocation5 + $0xb8] sm:$0xff]
    %v205 = vld [vmem:[#allocation5 + $0xc0] sm:$0xff]
    %v206 = vld [vmem:[#allocation5 + $0xc8] sm:$0xff]
    %v207 = vld [vmem:[#allocation5 + $0xd0] sm:$0xff]
    %v208 = vld [vmem:[#allocation5 + $0xd8] sm:$0xff]
    %v209 = vld [vmem:[#allocation5 + $0xe0] sm:$0xff]
    %v210 = vld [vmem:[#allocation5 + $0xe8] sm:$0xff]
    %v211 = vld [vmem:[#allocation5 + $0xf0] sm:$0xff]
    %v212 = vld [vmem:[#allocation5 + $0xf8] sm:$0xff]
    %v213 = vld [vmem:[#allocation5 + $0x100] sm:$0xff]
    %v214 = vld [vmem:[#allocation5 + $0x108] sm:$0xff]
    %v215 = vld [vmem:[#allocation5 + $0x110] sm:$0xff]
    %v216 = vld [vmem:[#allocation5 + $0x118] sm:$0xff]
    %v217 = vld [vmem:[#allocation5 + $0x120] sm:$0xff]
    %v218 = vld [vmem:[#allocation5 + $0x128] sm:$0xff]
    %v219 = vld [vmem:[#allocation5 + $0x130] sm:$0xff]
    %v220 = vld [vmem:[#allocation5 + $0x138] sm:$0xff]
    %v221 = vld [vmem:[#allocation5 + $0x140] sm:$0xff]
    %v222 = vld [vmem:[#allocation5 + $0x148] sm:$0xff]
    %v223 = vld [vmem:[#allocation5 + $0x150] sm:$0xff]
    %v224 = vld [vmem:[#allocation5 + $0x158] sm:$0xff]
    %v225 = vld [vmem:[#allocation5 + $0x160] sm:$0xff]
    %v226 = vld [vmem:[#allocation5 + $0x168] sm:$0xff]
    %v227 = vld [vmem:[#allocation5 + $0x170] sm:$0xff]
    %v228 = vld [vmem:[#allocation5 + $0x178] sm:$0xff]
    %v229 = vld [vmem:[#allocation5 + $0x180] sm:$0xff]
    %v230 = vld [vmem:[#allocation5 + $0x188] sm:$0xff]
    %v231 = vld [vmem:[#allocation5 + $0x190] sm:$0xff]
    %v232 = vld [vmem:[#allocation5 + $0x198] sm:$0xff]
    %v233 = vld [vmem:[#allocation5 + $0x1a0] sm:$0xff]
    %v234 = vld [vmem:[#allocation5 + $0x1a8] sm:$0xff]
    %v235 = vld [vmem:[#allocation5 + $0x1b0] sm:$0xff]
    %v236 = vld [vmem:[#allocation5 + $0x1b8] sm:$0xff]
    %v237 = vld [vmem:[#allocation5 + $0x1c0] sm:$0xff]
    %v238 = vld [vmem:[#allocation5 + $0x1c8] sm:$0xff]
    %v239 = vld [vmem:[#allocation5 + $0x1d0] sm:$0xff]
    %v240 = vld [vmem:[#allocation5 + $0x1d8] sm:$0xff]
    %v241 = vld [vmem:[#allocation5 + $0x1e0] sm:$0xff]
    %v242 = vld [vmem:[#allocation5 + $0x1e8] sm:$0xff]
    %v243 = vld [vmem:[#allocation5 + $0x1f0] sm:$0xff]
    %v244 = vld [vmem:[#allocation5 + $0x1f8] sm:$0xff]
    %v245 = vld [vmem:[#allocation5 + $0x200] sm:$0xff]
    %v246 = vld [vmem:[#allocation5 + $0x208] sm:$0xff]
    %v247 = vld [vmem:[#allocation5 + $0x210] sm:$0xff]
    %v248 = vld [vmem:[#allocation5 + $0x218] sm:$0xff]
    %v249 = vld [vmem:[#allocation5 + $0x220] sm:$0xff]
    %v250 = vld [vmem:[#allocation5 + $0x228] sm:$0xff]
    %v251 = vld [vmem:[#allocation5 + $0x230] sm:$0xff]
    %v252 = vld [vmem:[#allocation5 + $0x238] sm:$0xff]
    %v253 = vld [vmem:[#allocation5 + $0x240] sm:$0xff]
    %v254 = vld [vmem:[#allocation5 + $0x248] sm:$0xff]
    %v255 = vld [vmem:[#allocation5 + $0x250] sm:$0xff]
    %v256 = vld [vmem:[#allocation5 + $0x258] sm:$0xff]
    %v257 = vld [vmem:[#allocation5 + $0x260] sm:$0xff]
    %v258 = vld [vmem:[#allocation5 + $0x268] sm:$0xff]
    %v259 = vld [vmem:[#allocation5 + $0x270] sm:$0xff]
    %v260 = vld [vmem:[#allocation5 + $0x278] sm:$0xff]
    %v261 = vld [vmem:[#allocation5 + $0x280] sm:$0xff]
    %v262 = vld [vmem:[#allocation5 + $0x288] sm:$0xff]
    %v263 = vld [vmem:[#allocation5 + $0x290] sm:$0xff]
    %v264 = vld [vmem:[#allocation5 + $0x298] sm:$0xff]
    %v265 = vld [vmem:[#allocation5 + $0x2a0] sm:$0xff]
    %v266 = vld [vmem:[#allocation5 + $0x2a8] sm:$0xff]
    %v267 = vld [vmem:[#allocation5 + $0x2b0] sm:$0xff]
    %v268 = vld [vmem:[#allocation5 + $0x2b8] sm:$0xff]
    %v269 = vld [vmem:[#allocation5 + $0x2c0] sm:$0xff]
    %v270 = vld [vmem:[#allocation5 + $0x2c8] sm:$0xff]
    %v271 = vld [vmem:[#allocation5 + $0x2d0] sm:$0xff]
    %v272 = vld [vmem:[#allocation5 + $0x2d8] sm:$0xff]
    %v273 = vld [vmem:[#allocation5 + $0x2e0] sm:$0xff]
    %v274 = vld [vmem:[#allocation5 + $0x2e8] sm:$0xff]
    %v275 = vld [vmem:[#allocation5 + $0x2f0] sm:$0xff]
    %v276 = vld [vmem:[#allocation5 + $0x2f8] sm:$0xff]
    %v277 = vld [vmem:[#allocation5 + $0x300] sm:$0xff]
    %v278 = vld [vmem:[#allocation5 + $0x308] sm:$0xff]
    %v279 = vld [vmem:[#allocation5 + $0x310] sm:$0xff]
    %v280 = vld [vmem:[#allocation5 + $0x318] sm:$0xff]
    %v281 = vld [vmem:[#allocation5 + $0x320] sm:$0xff]
    %v282 = vld [vmem:[#allocation5 + $0x328] sm:$0xff]
    %v283 = vld [vmem:[#allocation5 + $0x330] sm:$0xff]
    %v284 = vld [vmem:[#allocation5 + $0x338] sm:$0xff]
    %v285 = vld [vmem:[#allocation5 + $0x340] sm:$0xff]
    %v286 = vld [vmem:[#allocation5 + $0x348] sm:$0xff]
    %v287 = vld [vmem:[#allocation5 + $0x350] sm:$0xff]
    %v288 = vld [vmem:[#allocation5 + $0x358] sm:$0xff]
    %v289 = vld [vmem:[#allocation5 + $0x360] sm:$0xff]
    %v290 = vld [vmem:[#allocation5 + $0x368] sm:$0xff]
    %v291 = vld [vmem:[#allocation5 + $0x370] sm:$0xff]
    %v292 = vld [vmem:[#allocation5 + $0x378] sm:$0xff]
    %v293 = vld [vmem:[#allocation5 + $0x380] sm:$0xff]
    %v294 = vld [vmem:[#allocation5 + $0x388] sm:$0xff]
    %v295 = vld [vmem:[#allocation5 + $0x390] sm:$0xff]
    %v296 = vld [vmem:[#allocation5 + $0x398] sm:$0xff]
    %v297 = vld [vmem:[#allocation5 + $0x3a0] sm:$0xff]
    %v298 = vld [vmem:[#allocation5 + $0x3a8] sm:$0xff]
    %v299 = vld [vmem:[#allocation5 + $0x3b0] sm:$0xff]
    %v300 = vld [vmem:[#allocation5 + $0x3b8] sm:$0xff]
    %v301 = vld [vmem:[#allocation5 + $0x3c0] sm:$0xff]
    %v302 = vld [vmem:[#allocation5 + $0x3c8] sm:$0xff]
    %v303 = vld [vmem:[#allocation5 + $0x3d0] sm:$0xff]
    %v304 = vld [vmem:[#allocation5 + $0x3d8] sm:$0xff]
    %v305 = vld [vmem:[#allocation5 + $0x3e0] sm:$0xff]
    %v306 = vld [vmem:[#allocation5 + $0x3e8] sm:$0xff]
    %v307 = vld [vmem:[#allocation5 + $0x3f0] sm:$0xff]
    %v308 = vld [vmem:[#allocation5 + $0x3f8] sm:$0xff]
    %v309 = vld [vmem:[%s2] sm:$0x3]
    %v311 = vlaneseq
    %v312 = vshrl.u32 %v311, 7
    %v313 = vsub.s32 0, %v312
    %v314 = vrot.slane %v309, %v313
    %v315 = vlaneseq
    %v316 = vshrl.u32 %v315, 7
    %v317 = vsub.s32 1, %v316
    %v318 = vrot.slane %v309, %v317
    %v449 = vunpack.c.l.b16 %v53
    %v450 = vunpack.c.h.b16 %v53
    %v451 = vunpack.c.l.b16 %v54
    %v452 = vunpack.c.h.b16 %v54
    %v453 = vunpack.c.l.b16 %v55
    %v454 = vunpack.c.h.b16 %v55
    %v455 = vunpack.c.l.b16 %v56
    %v456 = vunpack.c.h.b16 %v56
    %v457 = vunpack.c.l.b16 %v57
    %v458 = vunpack.c.h.b16 %v57
    %v459 = vunpack.c.l.b16 %v58
    %v460 = vunpack.c.h.b16 %v58
    %v461 = vunpack.c.l.b16 %v59
    %v462 = vunpack.c.h.b16 %v59
    %v463 = vunpack.c.l.b16 %v60
    %v464 = vunpack.c.h.b16 %v60
    %v465 = vunpack.c.l.b16 %v61
    %v466 = vunpack.c.h.b16 %v61
    %v467 = vunpack.c.l.b16 %v62
    %v468 = vunpack.c.h.b16 %v62
    %v469 = vunpack.c.l.b16 %v63
    %v470 = vunpack.c.h.b16 %v63
    %v471 = vunpack.c.l.b16 %v64
    %v472 = vunpack.c.h.b16 %v64
    %v473 = vunpack.c.l.b16 %v65
    %v474 = vunpack.c.h.b16 %v65
    %v475 = vunpack.c.l.b16 %v66
    %v476 = vunpack.c.h.b16 %v66
    %v477 = vunpack.c.l.b16 %v67
    %v478 = vunpack.c.h.b16 %v67
    %v479 = vunpack.c.l.b16 %v68
    %v480 = vunpack.c.h.b16 %v68
    %v481 = vunpack.c.l.b16 %v69
    %v482 = vunpack.c.h.b16 %v69
    %v483 = vunpack.c.l.b16 %v70
    %v484 = vunpack.c.h.b16 %v70
    %v485 = vunpack.c.l.b16 %v71
    %v486 = vunpack.c.h.b16 %v71
    %v487 = vunpack.c.l.b16 %v72
    %v488 = vunpack.c.h.b16 %v72
    %v489 = vunpack.c.l.b16 %v73
    %v490 = vunpack.c.h.b16 %v73
    %v491 = vunpack.c.l.b16 %v74
    %v492 = vunpack.c.h.b16 %v74
    %v493 = vunpack.c.l.b16 %v75
    %v494 = vunpack.c.h.b16 %v75
    %v495 = vunpack.c.l.b16 %v76
    %v496 = vunpack.c.h.b16 %v76
    %v497 = vunpack.c.l.b16 %v77
    %v498 = vunpack.c.h.b16 %v77
    %v499 = vunpack.c.l.b16 %v78
    %v500 = vunpack.c.h.b16 %v78
    %v501 = vunpack.c.l.b16 %v79
    %v502 = vunpack.c.h.b16 %v79
    %v503 = vunpack.c.l.b16 %v80
    %v504 = vunpack.c.h.b16 %v80
    %v505 = vunpack.c.l.b16 %v81
    %v506 = vunpack.c.h.b16 %v81
    %v507 = vunpack.c.l.b16 %v82
    %v508 = vunpack.c.h.b16 %v82
    %v509 = vunpack.c.l.b16 %v83
    %v510 = vunpack.c.h.b16 %v83
    %v511 = vunpack.c.l.b16 %v84
    %v512 = vunpack.c.h.b16 %v84
    %v513 = vunpack.c.l.b16 %v85
    %v514 = vunpack.c.h.b16 %v85
    %v515 = vunpack.c.l.b16 %v86
    %v516 = vunpack.c.h.b16 %v86
    %v517 = vunpack.c.l.b16 %v87
    %v518 = vunpack.c.h.b16 %v87
    %v519 = vunpack.c.l.b16 %v88
    %v520 = vunpack.c.h.b16 %v88
    %v521 = vunpack.c.l.b16 %v89
    %v522 = vunpack.c.h.b16 %v89
    %v523 = vunpack.c.l.b16 %v90
    %v524 = vunpack.c.h.b16 %v90
    %v525 = vunpack.c.l.b16 %v91
    %v526 = vunpack.c.h.b16 %v91
    %v527 = vunpack.c.l.b16 %v92
    %v528 = vunpack.c.h.b16 %v92
    %v529 = vunpack.c.l.b16 %v93
    %v530 = vunpack.c.h.b16 %v93
    %v531 = vunpack.c.l.b16 %v94
    %v532 = vunpack.c.h.b16 %v94
    %v533 = vunpack.c.l.b16 %v95
    %v534 = vunpack.c.h.b16 %v95
    %v535 = vunpack.c.l.b16 %v96
    %v536 = vunpack.c.h.b16 %v96
    %v537 = vunpack.c.l.b16 %v97
    %v538 = vunpack.c.h.b16 %v97
    %v539 = vunpack.c.l.b16 %v98
    %v540 = vunpack.c.h.b16 %v98
    %v541 = vunpack.c.l.b16 %v99
    %v542 = vunpack.c.h.b16 %v99
    %v543 = vunpack.c.l.b16 %v100
    %v544 = vunpack.c.h.b16 %v100
    %v545 = vunpack.c.l.b16 %v101
    %v546 = vunpack.c.h.b16 %v101
    %v547 = vunpack.c.l.b16 %v102
    %v548 = vunpack.c.h.b16 %v102
    %v549 = vunpack.c.l.b16 %v103
    %v550 = vunpack.c.h.b16 %v103
    %v551 = vunpack.c.l.b16 %v104
    %v552 = vunpack.c.h.b16 %v104
    %v553 = vunpack.c.l.b16 %v105
    %v554 = vunpack.c.h.b16 %v105
    %v555 = vunpack.c.l.b16 %v106
    %v556 = vunpack.c.h.b16 %v106
    %v557 = vunpack.c.l.b16 %v107
    %v558 = vunpack.c.h.b16 %v107
    %v559 = vunpack.c.l.b16 %v108
    %v560 = vunpack.c.h.b16 %v108
    %v561 = vunpack.c.l.b16 %v109
    %v562 = vunpack.c.h.b16 %v109
    %v563 = vunpack.c.l.b16 %v110
    %v564 = vunpack.c.h.b16 %v110
    %v565 = vunpack.c.l.b16 %v111
    %v566 = vunpack.c.h.b16 %v111
    %v567 = vunpack.c.l.b16 %v112
    %v568 = vunpack.c.h.b16 %v112
    %v569 = vunpack.c.l.b16 %v113
    %v570 = vunpack.c.h.b16 %v113
    %v571 = vunpack.c.l.b16 %v114
    %v572 = vunpack.c.h.b16 %v114
    %v573 = vunpack.c.l.b16 %v115
    %v574 = vunpack.c.h.b16 %v115
    %v575 = vunpack.c.l.b16 %v116
    %v576 = vunpack.c.h.b16 %v116
    %v577 = vunpack.c.l.b16 %v117
    %v578 = vunpack.c.h.b16 %v117
    %v579 = vunpack.c.l.b16 %v118
    %v580 = vunpack.c.h.b16 %v118
    %v581 = vunpack.c.l.b16 %v119
    %v582 = vunpack.c.h.b16 %v119
    %v583 = vunpack.c.l.b16 %v120
    %v584 = vunpack.c.h.b16 %v120
    %v585 = vunpack.c.l.b16 %v121
    %v586 = vunpack.c.h.b16 %v121
    %v587 = vunpack.c.l.b16 %v122
    %v588 = vunpack.c.h.b16 %v122
    %v589 = vunpack.c.l.b16 %v123
    %v590 = vunpack.c.h.b16 %v123
    %v591 = vunpack.c.l.b16 %v124
    %v592 = vunpack.c.h.b16 %v124
    %v593 = vunpack.c.l.b16 %v125
    %v594 = vunpack.c.h.b16 %v125
    %v595 = vunpack.c.l.b16 %v126
    %v596 = vunpack.c.h.b16 %v126
    %v597 = vunpack.c.l.b16 %v127
    %v598 = vunpack.c.h.b16 %v127
    %v599 = vunpack.c.l.b16 %v128
    %v600 = vunpack.c.h.b16 %v128
    %v601 = vunpack.c.l.b16 %v129
    %v602 = vunpack.c.h.b16 %v129
    %v603 = vunpack.c.l.b16 %v130
    %v604 = vunpack.c.h.b16 %v130
    %v605 = vunpack.c.l.b16 %v131
    %v606 = vunpack.c.h.b16 %v131
    %v607 = vunpack.c.l.b16 %v132
    %v608 = vunpack.c.h.b16 %v132
    %v609 = vunpack.c.l.b16 %v133
    %v610 = vunpack.c.h.b16 %v133
    %v611 = vunpack.c.l.b16 %v134
    %v612 = vunpack.c.h.b16 %v134
    %v613 = vunpack.c.l.b16 %v135
    %v614 = vunpack.c.h.b16 %v135
    %v615 = vunpack.c.l.b16 %v136
    %v616 = vunpack.c.h.b16 %v136
    %v617 = vunpack.c.l.b16 %v137
    %v618 = vunpack.c.h.b16 %v137
    %v619 = vunpack.c.l.b16 %v138
    %v620 = vunpack.c.h.b16 %v138
    %v621 = vunpack.c.l.b16 %v139
    %v622 = vunpack.c.h.b16 %v139
    %v623 = vunpack.c.l.b16 %v140
    %v624 = vunpack.c.h.b16 %v140
    %v625 = vunpack.c.l.b16 %v141
    %v626 = vunpack.c.h.b16 %v141
    %v627 = vunpack.c.l.b16 %v142
    %v628 = vunpack.c.h.b16 %v142
    %v629 = vunpack.c.l.b16 %v143
    %v630 = vunpack.c.h.b16 %v143
    %v631 = vunpack.c.l.b16 %v144
    %v632 = vunpack.c.h.b16 %v144
    %v633 = vunpack.c.l.b16 %v145
    %v634 = vunpack.c.h.b16 %v145
    %v635 = vunpack.c.l.b16 %v146
    %v636 = vunpack.c.h.b16 %v146
    %v637 = vunpack.c.l.b16 %v147
    %v638 = vunpack.c.h.b16 %v147
    %v639 = vunpack.c.l.b16 %v148
    %v640 = vunpack.c.h.b16 %v148
    %v641 = vunpack.c.l.b16 %v149
    %v642 = vunpack.c.h.b16 %v149
    %v643 = vunpack.c.l.b16 %v150
    %v644 = vunpack.c.h.b16 %v150
    %v645 = vunpack.c.l.b16 %v151
    %v646 = vunpack.c.h.b16 %v151
    %v647 = vunpack.c.l.b16 %v152
    %v648 = vunpack.c.h.b16 %v152
    %v649 = vunpack.c.l.b16 %v153
    %v650 = vunpack.c.h.b16 %v153
    %v651 = vunpack.c.l.b16 %v154
    %v652 = vunpack.c.h.b16 %v154
    %v653 = vunpack.c.l.b16 %v155
    %v654 = vunpack.c.h.b16 %v155
    %v655 = vunpack.c.l.b16 %v156
    %v656 = vunpack.c.h.b16 %v156
    %v657 = vunpack.c.l.b16 %v157
    %v658 = vunpack.c.h.b16 %v157
    %v659 = vunpack.c.l.b16 %v158
    %v660 = vunpack.c.h.b16 %v158
    %v661 = vunpack.c.l.b16 %v159
    %v662 = vunpack.c.h.b16 %v159
    %v663 = vunpack.c.l.b16 %v160
    %v664 = vunpack.c.h.b16 %v160
    %v665 = vunpack.c.l.b16 %v161
    %v666 = vunpack.c.h.b16 %v161
    %v667 = vunpack.c.l.b16 %v162
    %v668 = vunpack.c.h.b16 %v162
    %v669 = vunpack.c.l.b16 %v163
    %v670 = vunpack.c.h.b16 %v163
    %v671 = vunpack.c.l.b16 %v164
    %v672 = vunpack.c.h.b16 %v164
    %v673 = vunpack.c.l.b16 %v165
    %v674 = vunpack.c.h.b16 %v165
    %v675 = vunpack.c.l.b16 %v166
    %v676 = vunpack.c.h.b16 %v166
    %v677 = vunpack.c.l.b16 %v167
    %v678 = vunpack.c.h.b16 %v167
    %v679 = vunpack.c.l.b16 %v168
    %v680 = vunpack.c.h.b16 %v168
    %v681 = vunpack.c.l.b16 %v169
    %v682 = vunpack.c.h.b16 %v169
    %v683 = vunpack.c.l.b16 %v170
    %v684 = vunpack.c.h.b16 %v170
    %v685 = vunpack.c.l.b16 %v171
    %v686 = vunpack.c.h.b16 %v171
    %v687 = vunpack.c.l.b16 %v172
    %v688 = vunpack.c.h.b16 %v172
    %v689 = vunpack.c.l.b16 %v173
    %v690 = vunpack.c.h.b16 %v173
    %v691 = vunpack.c.l.b16 %v174
    %v692 = vunpack.c.h.b16 %v174
    %v693 = vunpack.c.l.b16 %v175
    %v694 = vunpack.c.h.b16 %v175
    %v695 = vunpack.c.l.b16 %v176
    %v696 = vunpack.c.h.b16 %v176
    %v697 = vunpack.c.l.b16 %v177
    %v698 = vunpack.c.h.b16 %v177
    %v699 = vunpack.c.l.b16 %v178
    %v700 = vunpack.c.h.b16 %v178
    %v701 = vunpack.c.l.b16 %v179
    %v702 = vunpack.c.h.b16 %v179
    %v703 = vunpack.c.l.b16 %v180
    %v704 = vunpack.c.h.b16 %v180
    %v705 = vpack.c.b16 %v457, %v449
    %v706 = vpack.c.b16 %v458, %v450
    %v707 = vpack.c.b16 %v459, %v451
    %v708 = vpack.c.b16 %v460, %v452
    %v709 = vpack.c.b16 %v461, %v453
    %v710 = vpack.c.b16 %v462, %v454
    %v711 = vpack.c.b16 %v463, %v455
    %v712 = vpack.c.b16 %v464, %v456
    %v713 = vpack.c.b16 %v473, %v465
    %v714 = vpack.c.b16 %v474, %v466
    %v715 = vpack.c.b16 %v475, %v467
    %v716 = vpack.c.b16 %v476, %v468
    %v717 = vpack.c.b16 %v477, %v469
    %v718 = vpack.c.b16 %v478, %v470
    %v719 = vpack.c.b16 %v479, %v471
    %v720 = vpack.c.b16 %v480, %v472
    %v721 = vpack.c.b16 %v489, %v481
    %v722 = vpack.c.b16 %v490, %v482
    %v723 = vpack.c.b16 %v491, %v483
    %v724 = vpack.c.b16 %v492, %v484
    %v725 = vpack.c.b16 %v493, %v485
    %v726 = vpack.c.b16 %v494, %v486
    %v727 = vpack.c.b16 %v495, %v487
    %v728 = vpack.c.b16 %v496, %v488
    %v729 = vpack.c.b16 %v505, %v497
    %v730 = vpack.c.b16 %v506, %v498
    %v731 = vpack.c.b16 %v507, %v499
    %v732 = vpack.c.b16 %v508, %v500
    %v733 = vpack.c.b16 %v509, %v501
    %v734 = vpack.c.b16 %v510, %v502
    %v735 = vpack.c.b16 %v511, %v503
    %v736 = vpack.c.b16 %v512, %v504
    %v737 = vpack.c.b16 %v521, %v513
    %v738 = vpack.c.b16 %v522, %v514
    %v739 = vpack.c.b16 %v523, %v515
    %v740 = vpack.c.b16 %v524, %v516
    %v741 = vpack.c.b16 %v525, %v517
    %v742 = vpack.c.b16 %v526, %v518
    %v743 = vpack.c.b16 %v527, %v519
    %v744 = vpack.c.b16 %v528, %v520
    %v745 = vpack.c.b16 %v537, %v529
    %v746 = vpack.c.b16 %v538, %v530
    %v747 = vpack.c.b16 %v539, %v531
    %v748 = vpack.c.b16 %v540, %v532
    %v749 = vpack.c.b16 %v541, %v533
    %v750 = vpack.c.b16 %v542, %v534
    %v751 = vpack.c.b16 %v543, %v535
    %v752 = vpack.c.b16 %v544, %v536
    %v753 = vpack.c.b16 %v553, %v545
    %v754 = vpack.c.b16 %v554, %v546
    %v755 = vpack.c.b16 %v555, %v547
    %v756 = vpack.c.b16 %v556, %v548
    %v757 = vpack.c.b16 %v557, %v549
    %v758 = vpack.c.b16 %v558, %v550
    %v759 = vpack.c.b16 %v559, %v551
    %v760 = vpack.c.b16 %v560, %v552
    %v761 = vpack.c.b16 %v569, %v561
    %v762 = vpack.c.b16 %v570, %v562
    %v763 = vpack.c.b16 %v571, %v563
    %v764 = vpack.c.b16 %v572, %v564
    %v765 = vpack.c.b16 %v573, %v565
    %v766 = vpack.c.b16 %v574, %v566
    %v767 = vpack.c.b16 %v575, %v567
    %v768 = vpack.c.b16 %v576, %v568
    %v769 = vpack.c.b16 %v585, %v577
    %v770 = vpack.c.b16 %v586, %v578
    %v771 = vpack.c.b16 %v587, %v579
    %v772 = vpack.c.b16 %v588, %v580
    %v773 = vpack.c.b16 %v589, %v581
    %v774 = vpack.c.b16 %v590, %v582
    %v775 = vpack.c.b16 %v591, %v583
    %v776 = vpack.c.b16 %v592, %v584
    %v777 = vpack.c.b16 %v601, %v593
    %v778 = vpack.c.b16 %v602, %v594
    %v779 = vpack.c.b16 %v603, %v595
    %v780 = vpack.c.b16 %v604, %v596
    %v781 = vpack.c.b16 %v605, %v597
    %v782 = vpack.c.b16 %v606, %v598
    %v783 = vpack.c.b16 %v607, %v599
    %v784 = vpack.c.b16 %v608, %v600
    %v785 = vpack.c.b16 %v617, %v609
    %v786 = vpack.c.b16 %v618, %v610
    %v787 = vpack.c.b16 %v619, %v611
    %v788 = vpack.c.b16 %v620, %v612
    %v789 = vpack.c.b16 %v621, %v613
    %v790 = vpack.c.b16 %v622, %v614
    %v791 = vpack.c.b16 %v623, %v615
    %v792 = vpack.c.b16 %v624, %v616
    %v793 = vpack.c.b16 %v633, %v625
    %v794 = vpack.c.b16 %v634, %v626
    %v795 = vpack.c.b16 %v635, %v627
    %v796 = vpack.c.b16 %v636, %v628
    %v797 = vpack.c.b16 %v637, %v629
    %v798 = vpack.c.b16 %v638, %v630
    %v799 = vpack.c.b16 %v639, %v631
    %v800 = vpack.c.b16 %v640, %v632
    %v801 = vpack.c.b16 %v649, %v641
    %v802 = vpack.c.b16 %v650, %v642
    %v803 = vpack.c.b16 %v651, %v643
    %v804 = vpack.c.b16 %v652, %v644
    %v805 = vpack.c.b16 %v653, %v645
    %v806 = vpack.c.b16 %v654, %v646
    %v807 = vpack.c.b16 %v655, %v647
    %v808 = vpack.c.b16 %v656, %v648
    %v809 = vpack.c.b16 %v665, %v657
    %v810 = vpack.c.b16 %v666, %v658
    %v811 = vpack.c.b16 %v667, %v659
    %v812 = vpack.c.b16 %v668, %v660
    %v813 = vpack.c.b16 %v669, %v661
    %v814 = vpack.c.b16 %v670, %v662
    %v815 = vpack.c.b16 %v671, %v663
    %v816 = vpack.c.b16 %v672, %v664
    %v817 = vpack.c.b16 %v681, %v673
    %v818 = vpack.c.b16 %v682, %v674
    %v819 = vpack.c.b16 %v683, %v675
    %v820 = vpack.c.b16 %v684, %v676
    %v821 = vpack.c.b16 %v685, %v677
    %v822 = vpack.c.b16 %v686, %v678
    %v823 = vpack.c.b16 %v687, %v679
    %v824 = vpack.c.b16 %v688, %v680
    %v825 = vpack.c.b16 %v697, %v689
    %v826 = vpack.c.b16 %v698, %v690
    %v827 = vpack.c.b16 %v699, %v691
    %v828 = vpack.c.b16 %v700, %v692
    %v829 = vpack.c.b16 %v701, %v693
    %v830 = vpack.c.b16 %v702, %v694
    %v831 = vpack.c.b16 %v703, %v695
    %v832 = vpack.c.b16 %v704, %v696
    %v1089 = vunpack.c.l.b16 %v181
    %v1090 = vunpack.c.h.b16 %v181
    %v1091 = vunpack.c.l.b16 %v182
    %v1092 = vunpack.c.h.b16 %v182
    %v1093 = vunpack.c.l.b16 %v183
    %v1094 = vunpack.c.h.b16 %v183
    %v1095 = vunpack.c.l.b16 %v184
    %v1096 = vunpack.c.h.b16 %v184
    %v1097 = vunpack.c.l.b16 %v185
    %v1098 = vunpack.c.h.b16 %v185
    %v1099 = vunpack.c.l.b16 %v186
    %v1100 = vunpack.c.h.b16 %v186
    %v1101 = vunpack.c.l.b16 %v187
    %v1102 = vunpack.c.h.b16 %v187
    %v1103 = vunpack.c.l.b16 %v188
    %v1104 = vunpack.c.h.b16 %v188
    %v1105 = vunpack.c.l.b16 %v189
    %v1106 = vunpack.c.h.b16 %v189
    %v1107 = vunpack.c.l.b16 %v190
    %v1108 = vunpack.c.h.b16 %v190
    %v1109 = vunpack.c.l.b16 %v191
    %v1110 = vunpack.c.h.b16 %v191
    %v1111 = vunpack.c.l.b16 %v192
    %v1112 = vunpack.c.h.b16 %v192
    %v1113 = vunpack.c.l.b16 %v193
    %v1114 = vunpack.c.h.b16 %v193
    %v1115 = vunpack.c.l.b16 %v194
    %v1116 = vunpack.c.h.b16 %v194
    %v1117 = vunpack.c.l.b16 %v195
    %v1118 = vunpack.c.h.b16 %v195
    %v1119 = vunpack.c.l.b16 %v196
    %v1120 = vunpack.c.h.b16 %v196
    %v1121 = vunpack.c.l.b16 %v197
    %v1122 = vunpack.c.h.b16 %v197
    %v1123 = vunpack.c.l.b16 %v198
    %v1124 = vunpack.c.h.b16 %v198
    %v1125 = vunpack.c.l.b16 %v199
    %v1126 = vunpack.c.h.b16 %v199
    %v1127 = vunpack.c.l.b16 %v200
    %v1128 = vunpack.c.h.b16 %v200
    %v1129 = vunpack.c.l.b16 %v201
    %v1130 = vunpack.c.h.b16 %v201
    %v1131 = vunpack.c.l.b16 %v202
    %v1132 = vunpack.c.h.b16 %v202
    %v1133 = vunpack.c.l.b16 %v203
    %v1134 = vunpack.c.h.b16 %v203
    %v1135 = vunpack.c.l.b16 %v204
    %v1136 = vunpack.c.h.b16 %v204
    %v1137 = vunpack.c.l.b16 %v205
    %v1138 = vunpack.c.h.b16 %v205
    %v1139 = vunpack.c.l.b16 %v206
    %v1140 = vunpack.c.h.b16 %v206
    %v1141 = vunpack.c.l.b16 %v207
    %v1142 = vunpack.c.h.b16 %v207
    %v1143 = vunpack.c.l.b16 %v208
    %v1144 = vunpack.c.h.b16 %v208
    %v1145 = vunpack.c.l.b16 %v209
    %v1146 = vunpack.c.h.b16 %v209
    %v1147 = vunpack.c.l.b16 %v210
    %v1148 = vunpack.c.h.b16 %v210
    %v1149 = vunpack.c.l.b16 %v211
    %v1150 = vunpack.c.h.b16 %v211
    %v1151 = vunpack.c.l.b16 %v212
    %v1152 = vunpack.c.h.b16 %v212
    %v1153 = vunpack.c.l.b16 %v213
    %v1154 = vunpack.c.h.b16 %v213
    %v1155 = vunpack.c.l.b16 %v214
    %v1156 = vunpack.c.h.b16 %v214
    %v1157 = vunpack.c.l.b16 %v215
    %v1158 = vunpack.c.h.b16 %v215
    %v1159 = vunpack.c.l.b16 %v216
    %v1160 = vunpack.c.h.b16 %v216
    %v1161 = vunpack.c.l.b16 %v217
    %v1162 = vunpack.c.h.b16 %v217
    %v1163 = vunpack.c.l.b16 %v218
    %v1164 = vunpack.c.h.b16 %v218
    %v1165 = vunpack.c.l.b16 %v219
    %v1166 = vunpack.c.h.b16 %v219
    %v1167 = vunpack.c.l.b16 %v220
    %v1168 = vunpack.c.h.b16 %v220
    %v1169 = vunpack.c.l.b16 %v221
    %v1170 = vunpack.c.h.b16 %v221
    %v1171 = vunpack.c.l.b16 %v222
    %v1172 = vunpack.c.h.b16 %v222
    %v1173 = vunpack.c.l.b16 %v223
    %v1174 = vunpack.c.h.b16 %v223
    %v1175 = vunpack.c.l.b16 %v224
    %v1176 = vunpack.c.h.b16 %v224
    %v1177 = vunpack.c.l.b16 %v225
    %v1178 = vunpack.c.h.b16 %v225
    %v1179 = vunpack.c.l.b16 %v226
    %v1180 = vunpack.c.h.b16 %v226
    %v1181 = vunpack.c.l.b16 %v227
    %v1182 = vunpack.c.h.b16 %v227
    %v1183 = vunpack.c.l.b16 %v228
    %v1184 = vunpack.c.h.b16 %v228
    %v1185 = vunpack.c.l.b16 %v229
    %v1186 = vunpack.c.h.b16 %v229
    %v1187 = vunpack.c.l.b16 %v230
    %v1188 = vunpack.c.h.b16 %v230
    %v1189 = vunpack.c.l.b16 %v231
    %v1190 = vunpack.c.h.b16 %v231
    %v1191 = vunpack.c.l.b16 %v232
    %v1192 = vunpack.c.h.b16 %v232
    %v1193 = vunpack.c.l.b16 %v233
    %v1194 = vunpack.c.h.b16 %v233
    %v1195 = vunpack.c.l.b16 %v234
    %v1196 = vunpack.c.h.b16 %v234
    %v1197 = vunpack.c.l.b16 %v235
    %v1198 = vunpack.c.h.b16 %v235
    %v1199 = vunpack.c.l.b16 %v236
    %v1200 = vunpack.c.h.b16 %v236
    %v1201 = vunpack.c.l.b16 %v237
    %v1202 = vunpack.c.h.b16 %v237
    %v1203 = vunpack.c.l.b16 %v238
    %v1204 = vunpack.c.h.b16 %v238
    %v1205 = vunpack.c.l.b16 %v239
    %v1206 = vunpack.c.h.b16 %v239
    %v1207 = vunpack.c.l.b16 %v240
    %v1208 = vunpack.c.h.b16 %v240
    %v1209 = vunpack.c.l.b16 %v241
    %v1210 = vunpack.c.h.b16 %v241
    %v1211 = vunpack.c.l.b16 %v242
    %v1212 = vunpack.c.h.b16 %v242
    %v1213 = vunpack.c.l.b16 %v243
    %v1214 = vunpack.c.h.b16 %v243
    %v1215 = vunpack.c.l.b16 %v244
    %v1216 = vunpack.c.h.b16 %v244
    %v1217 = vunpack.c.l.b16 %v245
    %v1218 = vunpack.c.h.b16 %v245
    %v1219 = vunpack.c.l.b16 %v246
    %v1220 = vunpack.c.h.b16 %v246
    %v1221 = vunpack.c.l.b16 %v247
    %v1222 = vunpack.c.h.b16 %v247
    %v1223 = vunpack.c.l.b16 %v248
    %v1224 = vunpack.c.h.b16 %v248
    %v1225 = vunpack.c.l.b16 %v249
    %v1226 = vunpack.c.h.b16 %v249
    %v1227 = vunpack.c.l.b16 %v250
    %v1228 = vunpack.c.h.b16 %v250
    %v1229 = vunpack.c.l.b16 %v251
    %v1230 = vunpack.c.h.b16 %v251
    %v1231 = vunpack.c.l.b16 %v252
    %v1232 = vunpack.c.h.b16 %v252
    %v1233 = vunpack.c.l.b16 %v253
    %v1234 = vunpack.c.h.b16 %v253
    %v1235 = vunpack.c.l.b16 %v254
    %v1236 = vunpack.c.h.b16 %v254
    %v1237 = vunpack.c.l.b16 %v255
    %v1238 = vunpack.c.h.b16 %v255
    %v1239 = vunpack.c.l.b16 %v256
    %v1240 = vunpack.c.h.b16 %v256
    %v1241 = vunpack.c.l.b16 %v257
    %v1242 = vunpack.c.h.b16 %v257
    %v1243 = vunpack.c.l.b16 %v258
    %v1244 = vunpack.c.h.b16 %v258
    %v1245 = vunpack.c.l.b16 %v259
    %v1246 = vunpack.c.h.b16 %v259
    %v1247 = vunpack.c.l.b16 %v260
    %v1248 = vunpack.c.h.b16 %v260
    %v1249 = vunpack.c.l.b16 %v261
    %v1250 = vunpack.c.h.b16 %v261
    %v1251 = vunpack.c.l.b16 %v262
    %v1252 = vunpack.c.h.b16 %v262
    %v1253 = vunpack.c.l.b16 %v263
    %v1254 = vunpack.c.h.b16 %v263
    %v1255 = vunpack.c.l.b16 %v264
    %v1256 = vunpack.c.h.b16 %v264
    %v1257 = vunpack.c.l.b16 %v265
    %v1258 = vunpack.c.h.b16 %v265
    %v1259 = vunpack.c.l.b16 %v266
    %v1260 = vunpack.c.h.b16 %v266
    %v1261 = vunpack.c.l.b16 %v267
    %v1262 = vunpack.c.h.b16 %v267
    %v1263 = vunpack.c.l.b16 %v268
    %v1264 = vunpack.c.h.b16 %v268
    %v1265 = vunpack.c.l.b16 %v269
    %v1266 = vunpack.c.h.b16 %v269
    %v1267 = vunpack.c.l.b16 %v270
    %v1268 = vunpack.c.h.b16 %v270
    %v1269 = vunpack.c.l.b16 %v271
    %v1270 = vunpack.c.h.b16 %v271
    %v1271 = vunpack.c.l.b16 %v272
    %v1272 = vunpack.c.h.b16 %v272
    %v1273 = vunpack.c.l.b16 %v273
    %v1274 = vunpack.c.h.b16 %v273
    %v1275 = vunpack.c.l.b16 %v274
    %v1276 = vunpack.c.h.b16 %v274
    %v1277 = vunpack.c.l.b16 %v275
    %v1278 = vunpack.c.h.b16 %v275
    %v1279 = vunpack.c.l.b16 %v276
    %v1280 = vunpack.c.h.b16 %v276
    %v1281 = vunpack.c.l.b16 %v277
    %v1282 = vunpack.c.h.b16 %v277
    %v1283 = vunpack.c.l.b16 %v278
    %v1284 = vunpack.c.h.b16 %v278
    %v1285 = vunpack.c.l.b16 %v279
    %v1286 = vunpack.c.h.b16 %v279
    %v1287 = vunpack.c.l.b16 %v280
    %v1288 = vunpack.c.h.b16 %v280
    %v1289 = vunpack.c.l.b16 %v281
    %v1290 = vunpack.c.h.b16 %v281
    %v1291 = vunpack.c.l.b16 %v282
    %v1292 = vunpack.c.h.b16 %v282
    %v1293 = vunpack.c.l.b16 %v283
    %v1294 = vunpack.c.h.b16 %v283
    %v1295 = vunpack.c.l.b16 %v284
    %v1296 = vunpack.c.h.b16 %v284
    %v1297 = vunpack.c.l.b16 %v285
    %v1298 = vunpack.c.h.b16 %v285
    %v1299 = vunpack.c.l.b16 %v286
    %v1300 = vunpack.c.h.b16 %v286
    %v1301 = vunpack.c.l.b16 %v287
    %v1302 = vunpack.c.h.b16 %v287
    %v1303 = vunpack.c.l.b16 %v288
    %v1304 = vunpack.c.h.b16 %v288
    %v1305 = vunpack.c.l.b16 %v289
    %v1306 = vunpack.c.h.b16 %v289
    %v1307 = vunpack.c.l.b16 %v290
    %v1308 = vunpack.c.h.b16 %v290
    %v1309 = vunpack.c.l.b16 %v291
    %v1310 = vunpack.c.h.b16 %v291
    %v1311 = vunpack.c.l.b16 %v292
    %v1312 = vunpack.c.h.b16 %v292
    %v1313 = vunpack.c.l.b16 %v293
    %v1314 = vunpack.c.h.b16 %v293
    %v1315 = vunpack.c.l.b16 %v294
    %v1316 = vunpack.c.h.b16 %v294
    %v1317 = vunpack.c.l.b16 %v295
    %v1318 = vunpack.c.h.b16 %v295
    %v1319 = vunpack.c.l.b16 %v296
    %v1320 = vunpack.c.h.b16 %v296
    %v1321 = vunpack.c.l.b16 %v297
    %v1322 = vunpack.c.h.b16 %v297
    %v1323 = vunpack.c.l.b16 %v298
    %v1324 = vunpack.c.h.b16 %v298
    %v1325 = vunpack.c.l.b16 %v299
    %v1326 = vunpack.c.h.b16 %v299
    %v1327 = vunpack.c.l.b16 %v300
    %v1328 = vunpack.c.h.b16 %v300
    %v1329 = vunpack.c.l.b16 %v301
    %v1330 = vunpack.c.h.b16 %v301
    %v1331 = vunpack.c.l.b16 %v302
    %v1332 = vunpack.c.h.b16 %v302
    %v1333 = vunpack.c.l.b16 %v303
    %v1334 = vunpack.c.h.b16 %v303
    %v1335 = vunpack.c.l.b16 %v304
    %v1336 = vunpack.c.h.b16 %v304
    %v1337 = vunpack.c.l.b16 %v305
    %v1338 = vunpack.c.h.b16 %v305
    %v1339 = vunpack.c.l.b16 %v306
    %v1340 = vunpack.c.h.b16 %v306
    %v1341 = vunpack.c.l.b16 %v307
    %v1342 = vunpack.c.h.b16 %v307
    %v1343 = vunpack.c.l.b16 %v308
    %v1344 = vunpack.c.h.b16 %v308
    %v1345 = vpack.c.b16 %v1091, %v1089
    %v1346 = vpack.c.b16 %v1092, %v1090
    %v1347 = vpack.c.b16 %v1095, %v1093
    %v1348 = vpack.c.b16 %v1096, %v1094
    %v1349 = vpack.c.b16 %v1099, %v1097
    %v1350 = vpack.c.b16 %v1100, %v1098
    %v1351 = vpack.c.b16 %v1103, %v1101
    %v1352 = vpack.c.b16 %v1104, %v1102
    %v1353 = vpack.c.b16 %v1107, %v1105
    %v1354 = vpack.c.b16 %v1108, %v1106
    %v1355 = vpack.c.b16 %v1111, %v1109
    %v1356 = vpack.c.b16 %v1112, %v1110
    %v1357 = vpack.c.b16 %v1115, %v1113
    %v1358 = vpack.c.b16 %v1116, %v1114
    %v1359 = vpack.c.b16 %v1119, %v1117
    %v1360 = vpack.c.b16 %v1120, %v1118
    %v1361 = vpack.c.b16 %v1123, %v1121
    %v1362 = vpack.c.b16 %v1124, %v1122
    %v1363 = vpack.c.b16 %v1127, %v1125
    %v1364 = vpack.c.b16 %v1128, %v1126
    %v1365 = vpack.c.b16 %v1131, %v1129
    %v1366 = vpack.c.b16 %v1132, %v1130
    %v1367 = vpack.c.b16 %v1135, %v1133
    %v1368 = vpack.c.b16 %v1136, %v1134
    %v1369 = vpack.c.b16 %v1139, %v1137
    %v1370 = vpack.c.b16 %v1140, %v1138
    %v1371 = vpack.c.b16 %v1143, %v1141
    %v1372 = vpack.c.b16 %v1144, %v1142
    %v1373 = vpack.c.b16 %v1147, %v1145
    %v1374 = vpack.c.b16 %v1148, %v1146
    %v1375 = vpack.c.b16 %v1151, %v1149
    %v1376 = vpack.c.b16 %v1152, %v1150
    %v1377 = vpack.c.b16 %v1155, %v1153
    %v1378 = vpack.c.b16 %v1156, %v1154
    %v1379 = vpack.c.b16 %v1159, %v1157
    %v1380 = vpack.c.b16 %v1160, %v1158
    %v1381 = vpack.c.b16 %v1163, %v1161
    %v1382 = vpack.c.b16 %v1164, %v1162
    %v1383 = vpack.c.b16 %v1167, %v1165
    %v1384 = vpack.c.b16 %v1168, %v1166
    %v1385 = vpack.c.b16 %v1171, %v1169
    %v1386 = vpack.c.b16 %v1172, %v1170
    %v1387 = vpack.c.b16 %v1175, %v1173
    %v1388 = vpack.c.b16 %v1176, %v1174
    %v1389 = vpack.c.b16 %v1179, %v1177
    %v1390 = vpack.c.b16 %v1180, %v1178
    %v1391 = vpack.c.b16 %v1183, %v1181
    %v1392 = vpack.c.b16 %v1184, %v1182
    %v1393 = vpack.c.b16 %v1187, %v1185
    %v1394 = vpack.c.b16 %v1188, %v1186
    %v1395 = vpack.c.b16 %v1191, %v1189
    %v1396 = vpack.c.b16 %v1192, %v1190
    %v1397 = vpack.c.b16 %v1195, %v1193
    %v1398 = vpack.c.b16 %v1196, %v1194
    %v1399 = vpack.c.b16 %v1199, %v1197
    %v1400 = vpack.c.b16 %v1200, %v1198
    %v1401 = vpack.c.b16 %v1203, %v1201
    %v1402 = vpack.c.b16 %v1204, %v1202
    %v1403 = vpack.c.b16 %v1207, %v1205
    %v1404 = vpack.c.b16 %v1208, %v1206
    %v1405 = vpack.c.b16 %v1211, %v1209
    %v1406 = vpack.c.b16 %v1212, %v1210
    %v1407 = vpack.c.b16 %v1215, %v1213
    %v1408 = vpack.c.b16 %v1216, %v1214
    %v1409 = vpack.c.b16 %v1219, %v1217
    %v1410 = vpack.c.b16 %v1220, %v1218
    %v1411 = vpack.c.b16 %v1223, %v1221
    %v1412 = vpack.c.b16 %v1224, %v1222
    %v1413 = vpack.c.b16 %v1227, %v1225
    %v1414 = vpack.c.b16 %v1228, %v1226
    %v1415 = vpack.c.b16 %v1231, %v1229
    %v1416 = vpack.c.b16 %v1232, %v1230
    %v1417 = vpack.c.b16 %v1235, %v1233
    %v1418 = vpack.c.b16 %v1236, %v1234
    %v1419 = vpack.c.b16 %v1239, %v1237
    %v1420 = vpack.c.b16 %v1240, %v1238
    %v1421 = vpack.c.b16 %v1243, %v1241
    %v1422 = vpack.c.b16 %v1244, %v1242
    %v1423 = vpack.c.b16 %v1247, %v1245
    %v1424 = vpack.c.b16 %v1248, %v1246
    %v1425 = vpack.c.b16 %v1251, %v1249
    %v1426 = vpack.c.b16 %v1252, %v1250
    %v1427 = vpack.c.b16 %v1255, %v1253
    %v1428 = vpack.c.b16 %v1256, %v1254
    %v1429 = vpack.c.b16 %v1259, %v1257
    %v1430 = vpack.c.b16 %v1260, %v1258
    %v1431 = vpack.c.b16 %v1263, %v1261
    %v1432 = vpack.c.b16 %v1264, %v1262
    %v1433 = vpack.c.b16 %v1267, %v1265
    %v1434 = vpack.c.b16 %v1268, %v1266
    %v1435 = vpack.c.b16 %v1271, %v1269
    %v1436 = vpack.c.b16 %v1272, %v1270
    %v1437 = vpack.c.b16 %v1275, %v1273
    %v1438 = vpack.c.b16 %v1276, %v1274
    %v1439 = vpack.c.b16 %v1279, %v1277
    %v1440 = vpack.c.b16 %v1280, %v1278
    %v1441 = vpack.c.b16 %v1283, %v1281
    %v1442 = vpack.c.b16 %v1284, %v1282
    %v1443 = vpack.c.b16 %v1287, %v1285
    %v1444 = vpack.c.b16 %v1288, %v1286
    %v1445 = vpack.c.b16 %v1291, %v1289
    %v1446 = vpack.c.b16 %v1292, %v1290
    %v1447 = vpack.c.b16 %v1295, %v1293
    %v1448 = vpack.c.b16 %v1296, %v1294
    %v1449 = vpack.c.b16 %v1299, %v1297
    %v1450 = vpack.c.b16 %v1300, %v1298
    %v1451 = vpack.c.b16 %v1303, %v1301
    %v1452 = vpack.c.b16 %v1304, %v1302
    %v1453 = vpack.c.b16 %v1307, %v1305
    %v1454 = vpack.c.b16 %v1308, %v1306
    %v1455 = vpack.c.b16 %v1311, %v1309
    %v1456 = vpack.c.b16 %v1312, %v1310
    %v1457 = vpack.c.b16 %v1315, %v1313
    %v1458 = vpack.c.b16 %v1316, %v1314
    %v1459 = vpack.c.b16 %v1319, %v1317
    %v1460 = vpack.c.b16 %v1320, %v1318
    %v1461 = vpack.c.b16 %v1323, %v1321
    %v1462 = vpack.c.b16 %v1324, %v1322
    %v1463 = vpack.c.b16 %v1327, %v1325
    %v1464 = vpack.c.b16 %v1328, %v1326
    %v1465 = vpack.c.b16 %v1331, %v1329
    %v1466 = vpack.c.b16 %v1332, %v1330
    %v1467 = vpack.c.b16 %v1335, %v1333
    %v1468 = vpack.c.b16 %v1336, %v1334
    %v1469 = vpack.c.b16 %v1339, %v1337
    %v1470 = vpack.c.b16 %v1340, %v1338
    %v1471 = vpack.c.b16 %v1343, %v1341
    %v1472 = vpack.c.b16 %v1344, %v1342
    %1601 = vmatprep.subr.bf16.mxu0 %v1346
    %1602 = vmatpush1.bf16.msra.mxu0 %v1345
    %1603 = vmatprep.subr.bf16.mxu0 %v1348
    %1604 = vmatpush1.bf16.msra.mxu0 %v1347
    %1605 = vmatprep.subr.bf16.mxu0 %v1350
    %1606 = vmatpush1.bf16.msra.mxu0 %v1349
    %1607 = vmatprep.subr.bf16.mxu0 %v1352
    %1608 = vmatpush1.bf16.msra.mxu0 %v1351
    %1609 = vmatprep.subr.bf16.mxu0 %v1354
    %1610 = vmatpush1.bf16.msra.mxu0 %v1353
    %1611 = vmatprep.subr.bf16.mxu0 %v1356
    %1612 = vmatpush1.bf16.msra.mxu0 %v1355
    %1613 = vmatprep.subr.bf16.mxu0 %v1358
    %1614 = vmatpush1.bf16.msra.mxu0 %v1357
    %1615 = vmatprep.subr.bf16.mxu0 %v1360
    %1616 = vmatpush1.bf16.msra.mxu0 %v1359
    %1617 = vmatprep.subr.bf16.mxu0 %v1362
    %1618 = vmatpush1.bf16.msra.mxu0 %v1361
    %1619 = vmatprep.subr.bf16.mxu0 %v1364
    %1620 = vmatpush1.bf16.msra.mxu0 %v1363
    %1621 = vmatprep.subr.bf16.mxu0 %v1366
    %1622 = vmatpush1.bf16.msra.mxu0 %v1365
    %1623 = vmatprep.subr.bf16.mxu0 %v1368
    %1624 = vmatpush1.bf16.msra.mxu0 %v1367
    %1625 = vmatprep.subr.bf16.mxu0 %v1370
    %1626 = vmatpush1.bf16.msra.mxu0 %v1369
    %1627 = vmatprep.subr.bf16.mxu0 %v1372
    %1628 = vmatpush1.bf16.msra.mxu0 %v1371
    %1629 = vmatprep.subr.bf16.mxu0 %v1374
    %1630 = vmatpush1.bf16.msra.mxu0 %v1373
    %1631 = vmatprep.subr.bf16.mxu0 %v1376
    %1632 = vmatpush1.bf16.msra.mxu0 %v1375
    %1633 = vmatprep.mubr.bf16.mxu0 %v706
    %1634 = vmatmul.mubr.bf16.gmra.mrb[0].mxu0 %v705
    %v1635 = vpop.f32.mrb[0].mxu0
    %v1636 = vadd.f32 %v314, %v1635
    %v1637 = vpop.f32.mrb[0].mxu0
    %v1638 = vadd.f32 %v318, %v1637
    %v1639 = vpop.f32.mrb[0].mxu0
    %v1640 = vadd.f32 %v314, %v1639
    %v1641 = vpop.f32.mrb[0].mxu0
    %v1642 = vadd.f32 %v318, %v1641
    %1643 = vmatprep.mubr.bf16.mxu0 %v714
    %1644 = vmatmul.mubr.bf16.gmra.mrb[0].mxu0 %v713
    %v1645 = vpop.f32.mrb[0].mxu0
    %v1646 = vadd.f32 %v314, %v1645
    %v1647 = vpop.f32.mrb[0].mxu0
    %v1648 = vadd.f32 %v318, %v1647
    %v1649 = vpop.f32.mrb[0].mxu0
    %v1650 = vadd.f32 %v314, %v1649
    %v1651 = vpop.f32.mrb[0].mxu0
    %v1652 = vadd.f32 %v318, %v1651
    %1653 = vmatprep.mubr.bf16.mxu0 %v722
    %1654 = vmatmul.mubr.bf16.gmra.mrb[0].mxu0 %v721
    %v1655 = vpop.f32.mrb[0].mxu0
    %v1656 = vadd.f32 %v314, %v1655
    %v1657 = vpop.f32.mrb[0].mxu0
    %v1658 = vadd.f32 %v318, %v1657
    %v1659 = vpop.f32.mrb[0].mxu0
    %v1660 = vadd.f32 %v314, %v1659
    %v1661 = vpop.f32.mrb[0].mxu0
    %v1662 = vadd.f32 %v318, %v1661
    %1663 = vmatprep.mubr.bf16.mxu0 %v730
    %1664 = vmatmul.mubr.bf16.gmra.mrb[0].mxu0 %v729
    %v1665 = vpop.f32.mrb[0].mxu0
    %v1666 = vadd.f32 %v314, %v1665
    %v1667 = vpop.f32.mrb[0].mxu0
    %v1668 = vadd.f32 %v318, %v1667
    %v1669 = vpop.f32.mrb[0].mxu0
    %v1670 = vadd.f32 %v314, %v1669
    %v1671 = vpop.f32.mrb[0].mxu0
    %v1672 = vadd.f32 %v318, %v1671
    %1673 = vmatprep.mubr.bf16.mxu0 %v738
    %1674 = vmatmul.mubr.bf16.gmra.mrb[0].mxu0 %v737
    %v1675 = vpop.f32.mrb[0].mxu0
    %v1676 = vadd.f32 %v314, %v1675
    %v1677 = vpop.f32.mrb[0].mxu0
    %v1678 = vadd.f32 %v318, %v1677
    %v1679 = vpop.f32.mrb[0].mxu0
    %v1680 = vadd.f32 %v314, %v1679
    %v1681 = vpop.f32.mrb[0].mxu0
    %v1682 = vadd.f32 %v318, %v1681
    %1683 = vmatprep.mubr.bf16.mxu0 %v746
    %1684 = vmatmul.mubr.bf16.gmra.mrb[0].mxu0 %v745
    %v1685 = vpop.f32.mrb[0].mxu0
    %v1686 = vadd.f32 %v314, %v1685
    %v1687 = vpop.f32.mrb[0].mxu0
    %v1688 = vadd.f32 %v318, %v1687
    %v1689 = vpop.f32.mrb[0].mxu0
    %v1690 = vadd.f32 %v314, %v1689
    %v1691 = vpop.f32.mrb[0].mxu0
    %v1692 = vadd.f32 %v318, %v1691
    %1693 = vmatprep.mubr.bf16.mxu0 %v754
    %1694 = vmatmul.mubr.bf16.gmra.mrb[0].mxu0 %v753
    %v1695 = vpop.f32.mrb[0].mxu0
    %v1696 = vadd.f32 %v314, %v1695
    %v1697 = vpop.f32.mrb[0].mxu0
    %v1698 = vadd.f32 %v318, %v1697
    %v1699 = vpop.f32.mrb[0].mxu0
    %v1700 = vadd.f32 %v314, %v1699
    %v1701 = vpop.f32.mrb[0].mxu0
    %v1702 = vadd.f32 %v318, %v1701
    %1703 = vmatprep.mubr.bf16.mxu0 %v762
    %1704 = vmatmul.mubr.bf16.gmra.mrb[0].mxu0 %v761
    %v1705 = vpop.f32.mrb[0].mxu0
    %v1706 = vadd.f32 %v314, %v1705
    %v1707 = vpop.f32.mrb[0].mxu0
    %v1708 = vadd.f32 %v318, %v1707
    %v1709 = vpop.f32.mrb[0].mxu0
    %v1710 = vadd.f32 %v314, %v1709
    %v1711 = vpop.f32.mrb[0].mxu0
    %v1712 = vadd.f32 %v318, %v1711
    %1713 = vmatprep.mubr.bf16.mxu0 %v770
    %1714 = vmatmul.mubr.bf16.gmra.mrb[0].mxu0 %v769
    %v1715 = vpop.f32.mrb[0].mxu0
    %v1716 = vadd.f32 %v314, %v1715
    %v1717 = vpop.f32.mrb[0].mxu0
    %v1718 = vadd.f32 %v318, %v1717
    %v1719 = vpop.f32.mrb[0].mxu0
    %v1720 = vadd.f32 %v314, %v1719
    %v1721 = vpop.f32.mrb[0].mxu0
    %v1722 = vadd.f32 %v318, %v1721
    %1723 = vmatprep.mubr.bf16.mxu0 %v778
    %1724 = vmatmul.mubr.bf16.gmra.mrb[0].mxu0 %v777
    %v1725 = vpop.f32.mrb[0].mxu0
    %v1726 = vadd.f32 %v314, %v1725
    %v1727 = vpop.f32.mrb[0].mxu0
    %v1728 = vadd.f32 %v318, %v1727
    %v1729 = vpop.f32.mrb[0].mxu0
    %v1730 = vadd.f32 %v314, %v1729
    %v1731 = vpop.f32.mrb[0].mxu0
    %v1732 = vadd.f32 %v318, %v1731
    %1733 = vmatprep.mubr.bf16.mxu0 %v786
    %1734 = vmatmul.mubr.bf16.gmra.mrb[0].mxu0 %v785
    %v1735 = vpop.f32.mrb[0].mxu0
    %v1736 = vadd.f32 %v314, %v1735
    %v1737 = vpop.f32.mrb[0].mxu0
    %v1738 = vadd.f32 %v318, %v1737
    %v1739 = vpop.f32.mrb[0].mxu0
    %v1740 = vadd.f32 %v314, %v1739
    %v1741 = vpop.f32.mrb[0].mxu0
    %v1742 = vadd.f32 %v318, %v1741
    %1743 = vmatprep.mubr.bf16.mxu0 %v794
    %1744 = vmatmul.mubr.bf16.gmra.mrb[0].mxu0 %v793
    %v1745 = vpop.f32.mrb[0].mxu0
    %v1746 = vadd.f32 %v314, %v1745
    %v1747 = vpop.f32.mrb[0].mxu0
    %v1748 = vadd.f32 %v318, %v1747
    %v1749 = vpop.f32.mrb[0].mxu0
    %v1750 = vadd.f32 %v314, %v1749
    %v1751 = vpop.f32.mrb[0].mxu0
    %v1752 = vadd.f32 %v318, %v1751
    %1753 = vmatprep.mubr.bf16.mxu0 %v802
    %1754 = vmatmul.mubr.bf16.gmra.mrb[0].mxu0 %v801
    %v1755 = vpop.f32.mrb[0].mxu0
    %v1756 = vadd.f32 %v314, %v1755
    %v1757 = vpop.f32.mrb[0].mxu0
    %v1758 = vadd.f32 %v318, %v1757
    %v1759 = vpop.f32.mrb[0].mxu0
    %v1760 = vadd.f32 %v314, %v1759
    %v1761 = vpop.f32.mrb[0].mxu0
    %v1762 = vadd.f32 %v318, %v1761
    %1763 = vmatprep.mubr.bf16.mxu0 %v810
    %1764 = vmatmul.mubr.bf16.gmra.mrb[0].mxu0 %v809
    %v1765 = vpop.f32.mrb[0].mxu0
    %v1766 = vadd.f32 %v314, %v1765
    %v1767 = vpop.f32.mrb[0].mxu0
    %v1768 = vadd.f32 %v318, %v1767
    %v1769 = vpop.f32.mrb[0].mxu0
    %v1770 = vadd.f32 %v314, %v1769
    %v1771 = vpop.f32.mrb[0].mxu0
    %v1772 = vadd.f32 %v318, %v1771
    %1773 = vmatprep.mubr.bf16.mxu0 %v818
    %1774 = vmatmul.mubr.bf16.gmra.mrb[0].mxu0 %v817
    %v1775 = vpop.f32.mrb[0].mxu0
    %v1776 = vadd.f32 %v314, %v1775
    %v1777 = vpop.f32.mrb[0].mxu0
    %v1778 = vadd.f32 %v318, %v1777
    %v1779 = vpop.f32.mrb[0].mxu0
    %v1780 = vadd.f32 %v314, %v1779
    %v1781 = vpop.f32.mrb[0].mxu0
    %v1782 = vadd.f32 %v318, %v1781
    %1783 = vmatprep.mubr.bf16.mxu0 %v826
    %1784 = vmatmul.mubr.bf16.gmra.mrb[0].mxu0 %v825
    %v1785 = vpop.f32.mrb[0].mxu0
    %v1786 = vadd.f32 %v314, %v1785
    %v1787 = vpop.f32.mrb[0].mxu0
    %v1788 = vadd.f32 %v318, %v1787
    %v1789 = vpop.f32.mrb[0].mxu0
    %v1790 = vadd.f32 %v314, %v1789
    %v1791 = vpop.f32.mrb[0].mxu0
    %v1792 = vadd.f32 %v318, %v1791
    %1793 = vdwg.mxu0
    %1794 = vmatprep.subr.bf16.mxu0 %v1378
    %1795 = vmatpush1.bf16.msra.mxu0 %v1377
    %1796 = vmatprep.subr.bf16.mxu0 %v1380
    %1797 = vmatpush1.bf16.msra.mxu0 %v1379
    %1798 = vmatprep.subr.bf16.mxu0 %v1382
    %1799 = vmatpush1.bf16.msra.mxu0 %v1381
    %1800 = vmatprep.subr.bf16.mxu0 %v1384
    %1801 = vmatpush1.bf16.msra.mxu0 %v1383
    %1802 = vmatprep.subr.bf16.mxu0 %v1386
    %1803 = vmatpush1.bf16.msra.mxu0 %v1385
    %1804 = vmatprep.subr.bf16.mxu0 %v1388
    %1805 = vmatpush1.bf16.msra.mxu0 %v1387
    %1806 = vmatprep.subr.bf16.mxu0 %v1390
    %1807 = vmatpush1.bf16.msra.mxu0 %v1389
    %1808 = vmatprep.subr.bf16.mxu0 %v1392
    %1809 = vmatpush1.bf16.msra.mxu0 %v1391
    %1810 = vmatprep.subr.bf16.mxu0 %v1394
    %1811 = vmatpush1.bf16.msra.mxu0 %v1393
    %1812 = vmatprep.subr.bf16.mxu0 %v1396
    %1813 = vmatpush1.bf16.msra.mxu0 %v1395
    %1814 = vmatprep.subr.bf16.mxu0 %v1398
    %1815 = vmatpush1.bf16.msra.mxu0 %v1397
    %1816 = vmatprep.subr.bf16.mxu0 %v1400
    %1817 = vmatpush1.bf16.msra.mxu0 %v1399
    %1818 = vmatprep.subr.bf16.mxu0 %v1402
    %1819 = vmatpush1.bf16.msra.mxu0 %v1401
    %1820 = vmatprep.subr.bf16.mxu0 %v1404
    %1821 = vmatpush1.bf16.msra.mxu0 %v1403
    %1822 = vmatprep.subr.bf16.mxu0 %v1406
    %1823 = vmatpush1.bf16.msra.mxu0 %v1405
    %1824 = vmatprep.subr.bf16.mxu0 %v1408
    %1825 = vmatpush1.bf16.msra.mxu0 %v1407
    %1826 = vmatprep.mubr.bf16.mxu0 %v708
    %1827 = vmatmul.mubr.bf16.gmra.mrb[0].mxu0 %v707
    %v1828 = vpop.f32.mrb[0].mxu0
    %v1829 = vadd.f32 %v1636, %v1828
    %v1830 = vpop.f32.mrb[0].mxu0
    %v1831 = vadd.f32 %v1638, %v1830
    %v1832 = vpop.f32.mrb[0].mxu0
    %v1833 = vadd.f32 %v1640, %v1832
    %v1834 = vpop.f32.mrb[0].mxu0
    %v1835 = vadd.f32 %v1642, %v1834
    %1836 = vmatprep.mubr.bf16.mxu0 %v716
    %1837 = vmatmul.mubr.bf16.gmra.mrb[0].mxu0 %v715
    %v1838 = vpop.f32.mrb[0].mxu0
    %v1839 = vadd.f32 %v1646, %v1838
    %v1840 = vpop.f32.mrb[0].mxu0
    %v1841 = vadd.f32 %v1648, %v1840
    %v1842 = vpop.f32.mrb[0].mxu0
    %v1843 = vadd.f32 %v1650, %v1842
    %v1844 = vpop.f32.mrb[0].mxu0
    %v1845 = vadd.f32 %v1652, %v1844
    %1846 = vmatprep.mubr.bf16.mxu0 %v724
    %1847 = vmatmul.mubr.bf16.gmra.mrb[0].mxu0 %v723
    %v1848 = vpop.f32.mrb[0].mxu0
    %v1849 = vadd.f32 %v1656, %v1848
    %v1850 = vpop.f32.mrb[0].mxu0
    %v1851 = vadd.f32 %v1658, %v1850
    %v1852 = vpop.f32.mrb[0].mxu0
    %v1853 = vadd.f32 %v1660, %v1852
    %v1854 = vpop.f32.mrb[0].mxu0
    %v1855 = vadd.f32 %v1662, %v1854
    %1856 = vmatprep.mubr.bf16.mxu0 %v732
    %1857 = vmatmul.mubr.bf16.gmra.mrb[0].mxu0 %v731
    %v1858 = vpop.f32.mrb[0].mxu0
    %v1859 = vadd.f32 %v1666, %v1858
    %v1860 = vpop.f32.mrb[0].mxu0
    %v1861 = vadd.f32 %v1668, %v1860
    %v1862 = vpop.f32.mrb[0].mxu0
    %v1863 = vadd.f32 %v1670, %v1862
    %v1864 = vpop.f32.mrb[0].mxu0
    %v1865 = vadd.f32 %v1672, %v1864
    %1866 = vmatprep.mubr.bf16.mxu0 %v740
    %1867 = vmatmul.mubr.bf16.gmra.mrb[0].mxu0 %v739
    %v1868 = vpop.f32.mrb[0].mxu0
    %v1869 = vadd.f32 %v1676, %v1868
    %v1870 = vpop.f32.mrb[0].mxu0
    %v1871 = vadd.f32 %v1678, %v1870
    %v1872 = vpop.f32.mrb[0].mxu0
    %v1873 = vadd.f32 %v1680, %v1872
    %v1874 = vpop.f32.mrb[0].mxu0
    %v1875 = vadd.f32 %v1682, %v1874
    %1876 = vmatprep.mubr.bf16.mxu0 %v748
    %1877 = vmatmul.mubr.bf16.gmra.mrb[0].mxu0 %v747
    %v1878 = vpop.f32.mrb[0].mxu0
    %v1879 = vadd.f32 %v1686, %v1878
    %v1880 = vpop.f32.mrb[0].mxu0
    %v1881 = vadd.f32 %v1688, %v1880
    %v1882 = vpop.f32.mrb[0].mxu0
    %v1883 = vadd.f32 %v1690, %v1882
    %v1884 = vpop.f32.mrb[0].mxu0
    %v1885 = vadd.f32 %v1692, %v1884
    %1886 = vmatprep.mubr.bf16.mxu0 %v756
    %1887 = vmatmul.mubr.bf16.gmra.mrb[0].mxu0 %v755
    %v1888 = vpop.f32.mrb[0].mxu0
    %v1889 = vadd.f32 %v1696, %v1888
    %v1890 = vpop.f32.mrb[0].mxu0
    %v1891 = vadd.f32 %v1698, %v1890
    %v1892 = vpop.f32.mrb[0].mxu0
    %v1893 = vadd.f32 %v1700, %v1892
    %v1894 = vpop.f32.mrb[0].mxu0
    %v1895 = vadd.f32 %v1702, %v1894
    %1896 = vmatprep.mubr.bf16.mxu0 %v764
    %1897 = vmatmul.mubr.bf16.gmra.mrb[0].mxu0 %v763
    %v1898 = vpop.f32.mrb[0].mxu0
    %v1899 = vadd.f32 %v1706, %v1898
    %v1900 = vpop.f32.mrb[0].mxu0
    %v1901 = vadd.f32 %v1708, %v1900
    %v1902 = vpop.f32.mrb[0].mxu0
    %v1903 = vadd.f32 %v1710, %v1902
    %v1904 = vpop.f32.mrb[0].mxu0
    %v1905 = vadd.f32 %v1712, %v1904
    %1906 = vmatprep.mubr.bf16.mxu0 %v772
    %1907 = vmatmul.mubr.bf16.gmra.mrb[0].mxu0 %v771
    %v1908 = vpop.f32.mrb[0].mxu0
    %v1909 = vadd.f32 %v1716, %v1908
    %v1910 = vpop.f32.mrb[0].mxu0
    %v1911 = vadd.f32 %v1718, %v1910
    %v1912 = vpop.f32.mrb[0].mxu0
    %v1913 = vadd.f32 %v1720, %v1912
    %v1914 = vpop.f32.mrb[0].mxu0
    %v1915 = vadd.f32 %v1722, %v1914
    %1916 = vmatprep.mubr.bf16.mxu0 %v780
    %1917 = vmatmul.mubr.bf16.gmra.mrb[0].mxu0 %v779
    %v1918 = vpop.f32.mrb[0].mxu0
    %v1919 = vadd.f32 %v1726, %v1918
    %v1920 = vpop.f32.mrb[0].mxu0
    %v1921 = vadd.f32 %v1728, %v1920
    %v1922 = vpop.f32.mrb[0].mxu0
    %v1923 = vadd.f32 %v1730, %v1922
    %v1924 = vpop.f32.mrb[0].mxu0
    %v1925 = vadd.f32 %v1732, %v1924
    %1926 = vmatprep.mubr.bf16.mxu0 %v788
    %1927 = vmatmul.mubr.bf16.gmra.mrb[0].mxu0 %v787
    %v1928 = vpop.f32.mrb[0].mxu0
    %v1929 = vadd.f32 %v1736, %v1928
    %v1930 = vpop.f32.mrb[0].mxu0
    %v1931 = vadd.f32 %v1738, %v1930
    %v1932 = vpop.f32.mrb[0].mxu0
    %v1933 = vadd.f32 %v1740, %v1932
    %v1934 = vpop.f32.mrb[0].mxu0
    %v1935 = vadd.f32 %v1742, %v1934
    %1936 = vmatprep.mubr.bf16.mxu0 %v796
    %1937 = vmatmul.mubr.bf16.gmra.mrb[0].mxu0 %v795
    %v1938 = vpop.f32.mrb[0].mxu0
    %v1939 = vadd.f32 %v1746, %v1938
    %v1940 = vpop.f32.mrb[0].mxu0
    %v1941 = vadd.f32 %v1748, %v1940
    %v1942 = vpop.f32.mrb[0].mxu0
    %v1943 = vadd.f32 %v1750, %v1942
    %v1944 = vpop.f32.mrb[0].mxu0
    %v1945 = vadd.f32 %v1752, %v1944
    %1946 = vmatprep.mubr.bf16.mxu0 %v804
    %1947 = vmatmul.mubr.bf16.gmra.mrb[0].mxu0 %v803
    %v1948 = vpop.f32.mrb[0].mxu0
    %v1949 = vadd.f32 %v1756, %v1948
    %v1950 = vpop.f32.mrb[0].mxu0
    %v1951 = vadd.f32 %v1758, %v1950
    %v1952 = vpop.f32.mrb[0].mxu0
    %v1953 = vadd.f32 %v1760, %v1952
    %v1954 = vpop.f32.mrb[0].mxu0
    %v1955 = vadd.f32 %v1762, %v1954
    %1956 = vmatprep.mubr.bf16.mxu0 %v812
    %1957 = vmatmul.mubr.bf16.gmra.mrb[0].mxu0 %v811
    %v1958 = vpop.f32.mrb[0].mxu0
    %v1959 = vadd.f32 %v1766, %v1958
    %v1960 = vpop.f32.mrb[0].mxu0
    %v1961 = vadd.f32 %v1768, %v1960
    %v1962 = vpop.f32.mrb[0].mxu0
    %v1963 = vadd.f32 %v1770, %v1962
    %v1964 = vpop.f32.mrb[0].mxu0
    %v1965 = vadd.f32 %v1772, %v1964
    %1966 = vmatprep.mubr.bf16.mxu0 %v820
    %1967 = vmatmul.mubr.bf16.gmra.mrb[0].mxu0 %v819
    %v1968 = vpop.f32.mrb[0].mxu0
    %v1969 = vadd.f32 %v1776, %v1968
    %v1970 = vpop.f32.mrb[0].mxu0
    %v1971 = vadd.f32 %v1778, %v1970
    %v1972 = vpop.f32.mrb[0].mxu0
    %v1973 = vadd.f32 %v1780, %v1972
    %v1974 = vpop.f32.mrb[0].mxu0
    %v1975 = vadd.f32 %v1782, %v1974
    %1976 = vmatprep.mubr.bf16.mxu0 %v828
    %1977 = vmatmul.mubr.bf16.gmra.mrb[0].mxu0 %v827
    %v1978 = vpop.f32.mrb[0].mxu0
    %v1979 = vadd.f32 %v1786, %v1978
    %v1980 = vpop.f32.mrb[0].mxu0
    %v1981 = vadd.f32 %v1788, %v1980
    %v1982 = vpop.f32.mrb[0].mxu0
    %v1983 = vadd.f32 %v1790, %v1982
    %v1984 = vpop.f32.mrb[0].mxu0
    %v1985 = vadd.f32 %v1792, %v1984
    %1986 = vdwg.mxu0
    %1987 = vmatprep.subr.bf16.mxu0 %v1410
    %1988 = vmatpush1.bf16.msra.mxu0 %v1409
    %1989 = vmatprep.subr.bf16.mxu0 %v1412
    %1990 = vmatpush1.bf16.msra.mxu0 %v1411
    %1991 = vmatprep.subr.bf16.mxu0 %v1414
    %1992 = vmatpush1.bf16.msra.mxu0 %v1413
    %1993 = vmatprep.subr.bf16.mxu0 %v1416
    %1994 = vmatpush1.bf16.msra.mxu0 %v1415
    %1995 = vmatprep.subr.bf16.mxu0 %v1418
    %1996 = vmatpush1.bf16.msra.mxu0 %v1417
    %1997 = vmatprep.subr.bf16.mxu0 %v1420
    %1998 = vmatpush1.bf16.msra.mxu0 %v1419
    %1999 = vmatprep.subr.bf16.mxu0 %v1422
    %2000 = vmatpush1.bf16.msra.mxu0 %v1421
    %2001 = vmatprep.subr.bf16.mxu0 %v1424
    %2002 = vmatpush1.bf16.msra.mxu0 %v1423
    %2003 = vmatprep.subr.bf16.mxu0 %v1426
    %2004 = vmatpush1.bf16.msra.mxu0 %v1425
    %2005 = vmatprep.subr.bf16.mxu0 %v1428
    %2006 = vmatpush1.bf16.msra.mxu0 %v1427
    %2007 = vmatprep.subr.bf16.mxu0 %v1430
    %2008 = vmatpush1.bf16.msra.mxu0 %v1429
    %2009 = vmatprep.subr.bf16.mxu0 %v1432
    %2010 = vmatpush1.bf16.msra.mxu0 %v1431
    %2011 = vmatprep.subr.bf16.mxu0 %v1434
    %2012 = vmatpush1.bf16.msra.mxu0 %v1433
    %2013 = vmatprep.subr.bf16.mxu0 %v1436
    %2014 = vmatpush1.bf16.msra.mxu0 %v1435
    %2015 = vmatprep.subr.bf16.mxu0 %v1438
    %2016 = vmatpush1.bf16.msra.mxu0 %v1437
    %2017 = vmatprep.subr.bf16.mxu0 %v1440
    %2018 = vmatpush1.bf16.msra.mxu0 %v1439
    %2019 = vmatprep.mubr.bf16.mxu0 %v710
    %2020 = vmatmul.mubr.bf16.gmra.mrb[0].mxu0 %v709
    %v2021 = vpop.f32.mrb[0].mxu0
    %v2022 = vadd.f32 %v1829, %v2021
    %v2023 = vpop.f32.mrb[0].mxu0
    %v2024 = vadd.f32 %v1831, %v2023
    %v2025 = vpop.f32.mrb[0].mxu0
    %v2026 = vadd.f32 %v1833, %v2025
    %v2027 = vpop.f32.mrb[0].mxu0
    %v2028 = vadd.f32 %v1835, %v2027
    %2029 = vmatprep.mubr.bf16.mxu0 %v718
    %2030 = vmatmul.mubr.bf16.gmra.mrb[0].mxu0 %v717
    %v2031 = vpop.f32.mrb[0].mxu0
    %v2032 = vadd.f32 %v1839, %v2031
    %v2033 = vpop.f32.mrb[0].mxu0
    %v2034 = vadd.f32 %v1841, %v2033
    %v2035 = vpop.f32.mrb[0].mxu0
    %v2036 = vadd.f32 %v1843, %v2035
    %v2037 = vpop.f32.mrb[0].mxu0
    %v2038 = vadd.f32 %v1845, %v2037
    %2039 = vmatprep.mubr.bf16.mxu0 %v726
    %2040 = vmatmul.mubr.bf16.gmra.mrb[0].mxu0 %v725
    %v2041 = vpop.f32.mrb[0].mxu0
    %v2042 = vadd.f32 %v1849, %v2041
    %v2043 = vpop.f32.mrb[0].mxu0
    %v2044 = vadd.f32 %v1851, %v2043
    %v2045 = vpop.f32.mrb[0].mxu0
    %v2046 = vadd.f32 %v1853, %v2045
    %v2047 = vpop.f32.mrb[0].mxu0
    %v2048 = vadd.f32 %v1855, %v2047
    %2049 = vmatprep.mubr.bf16.mxu0 %v734
    %2050 = vmatmul.mubr.bf16.gmra.mrb[0].mxu0 %v733
    %v2051 = vpop.f32.mrb[0].mxu0
    %v2052 = vadd.f32 %v1859, %v2051
    %v2053 = vpop.f32.mrb[0].mxu0
    %v2054 = vadd.f32 %v1861, %v2053
    %v2055 = vpop.f32.mrb[0].mxu0
    %v2056 = vadd.f32 %v1863, %v2055
    %v2057 = vpop.f32.mrb[0].mxu0
    %v2058 = vadd.f32 %v1865, %v2057
    %2059 = vmatprep.mubr.bf16.mxu0 %v742
    %2060 = vmatmul.mubr.bf16.gmra.mrb[0].mxu0 %v741
    %v2061 = vpop.f32.mrb[0].mxu0
    %v2062 = vadd.f32 %v1869, %v2061
    %v2063 = vpop.f32.mrb[0].mxu0
    %v2064 = vadd.f32 %v1871, %v2063
    %v2065 = vpop.f32.mrb[0].mxu0
    %v2066 = vadd.f32 %v1873, %v2065
    %v2067 = vpop.f32.mrb[0].mxu0
    %v2068 = vadd.f32 %v1875, %v2067
    %2069 = vmatprep.mubr.bf16.mxu0 %v750
    %2070 = vmatmul.mubr.bf16.gmra.mrb[0].mxu0 %v749
    %v2071 = vpop.f32.mrb[0].mxu0
    %v2072 = vadd.f32 %v1879, %v2071
    %v2073 = vpop.f32.mrb[0].mxu0
    %v2074 = vadd.f32 %v1881, %v2073
    %v2075 = vpop.f32.mrb[0].mxu0
    %v2076 = vadd.f32 %v1883, %v2075
    %v2077 = vpop.f32.mrb[0].mxu0
    %v2078 = vadd.f32 %v1885, %v2077
    %2079 = vmatprep.mubr.bf16.mxu0 %v758
    %2080 = vmatmul.mubr.bf16.gmra.mrb[0].mxu0 %v757
    %v2081 = vpop.f32.mrb[0].mxu0
    %v2082 = vadd.f32 %v1889, %v2081
    %v2083 = vpop.f32.mrb[0].mxu0
    %v2084 = vadd.f32 %v1891, %v2083
    %v2085 = vpop.f32.mrb[0].mxu0
    %v2086 = vadd.f32 %v1893, %v2085
    %v2087 = vpop.f32.mrb[0].mxu0
    %v2088 = vadd.f32 %v1895, %v2087
    %2089 = vmatprep.mubr.bf16.mxu0 %v766
    %2090 = vmatmul.mubr.bf16.gmra.mrb[0].mxu0 %v765
    %v2091 = vpop.f32.mrb[0].mxu0
    %v2092 = vadd.f32 %v1899, %v2091
    %v2093 = vpop.f32.mrb[0].mxu0
    %v2094 = vadd.f32 %v1901, %v2093
    %v2095 = vpop.f32.mrb[0].mxu0
    %v2096 = vadd.f32 %v1903, %v2095
    %v2097 = vpop.f32.mrb[0].mxu0
    %v2098 = vadd.f32 %v1905, %v2097
    %2099 = vmatprep.mubr.bf16.mxu0 %v774
    %2100 = vmatmul.mubr.bf16.gmra.mrb[0].mxu0 %v773
    %v2101 = vpop.f32.mrb[0].mxu0
    %v2102 = vadd.f32 %v1909, %v2101
    %v2103 = vpop.f32.mrb[0].mxu0
    %v2104 = vadd.f32 %v1911, %v2103
    %v2105 = vpop.f32.mrb[0].mxu0
    %v2106 = vadd.f32 %v1913, %v2105
    %v2107 = vpop.f32.mrb[0].mxu0
    %v2108 = vadd.f32 %v1915, %v2107
    %2109 = vmatprep.mubr.bf16.mxu0 %v782
    %2110 = vmatmul.mubr.bf16.gmra.mrb[0].mxu0 %v781
    %v2111 = vpop.f32.mrb[0].mxu0
    %v2112 = vadd.f32 %v1919, %v2111
    %v2113 = vpop.f32.mrb[0].mxu0
    %v2114 = vadd.f32 %v1921, %v2113
    %v2115 = vpop.f32.mrb[0].mxu0
    %v2116 = vadd.f32 %v1923, %v2115
    %v2117 = vpop.f32.mrb[0].mxu0
    %v2118 = vadd.f32 %v1925, %v2117
    %2119 = vmatprep.mubr.bf16.mxu0 %v790
    %2120 = vmatmul.mubr.bf16.gmra.mrb[0].mxu0 %v789
    %v2121 = vpop.f32.mrb[0].mxu0
    %v2122 = vadd.f32 %v1929, %v2121
    %v2123 = vpop.f32.mrb[0].mxu0
    %v2124 = vadd.f32 %v1931, %v2123
    %v2125 = vpop.f32.mrb[0].mxu0
    %v2126 = vadd.f32 %v1933, %v2125
    %v2127 = vpop.f32.mrb[0].mxu0
    %v2128 = vadd.f32 %v1935, %v2127
    %2129 = vmatprep.mubr.bf16.mxu0 %v798
    %2130 = vmatmul.mubr.bf16.gmra.mrb[0].mxu0 %v797
    %v2131 = vpop.f32.mrb[0].mxu0
    %v2132 = vadd.f32 %v1939, %v2131
    %v2133 = vpop.f32.mrb[0].mxu0
    %v2134 = vadd.f32 %v1941, %v2133
    %v2135 = vpop.f32.mrb[0].mxu0
    %v2136 = vadd.f32 %v1943, %v2135
    %v2137 = vpop.f32.mrb[0].mxu0
    %v2138 = vadd.f32 %v1945, %v2137
    %2139 = vmatprep.mubr.bf16.mxu0 %v806
    %2140 = vmatmul.mubr.bf16.gmra.mrb[0].mxu0 %v805
    %v2141 = vpop.f32.mrb[0].mxu0
    %v2142 = vadd.f32 %v1949, %v2141
    %v2143 = vpop.f32.mrb[0].mxu0
    %v2144 = vadd.f32 %v1951, %v2143
    %v2145 = vpop.f32.mrb[0].mxu0
    %v2146 = vadd.f32 %v1953, %v2145
    %v2147 = vpop.f32.mrb[0].mxu0
    %v2148 = vadd.f32 %v1955, %v2147
    %2149 = vmatprep.mubr.bf16.mxu0 %v814
    %2150 = vmatmul.mubr.bf16.gmra.mrb[0].mxu0 %v813
    %v2151 = vpop.f32.mrb[0].mxu0
    %v2152 = vadd.f32 %v1959, %v2151
    %v2153 = vpop.f32.mrb[0].mxu0
    %v2154 = vadd.f32 %v1961, %v2153
    %v2155 = vpop.f32.mrb[0].mxu0
    %v2156 = vadd.f32 %v1963, %v2155
    %v2157 = vpop.f32.mrb[0].mxu0
    %v2158 = vadd.f32 %v1965, %v2157
    %2159 = vmatprep.mubr.bf16.mxu0 %v822
    %2160 = vmatmul.mubr.bf16.gmra.mrb[0].mxu0 %v821
    %v2161 = vpop.f32.mrb[0].mxu0
    %v2162 = vadd.f32 %v1969, %v2161
    %v2163 = vpop.f32.mrb[0].mxu0
    %v2164 = vadd.f32 %v1971, %v2163
    %v2165 = vpop.f32.mrb[0].mxu0
    %v2166 = vadd.f32 %v1973, %v2165
    %v2167 = vpop.f32.mrb[0].mxu0
    %v2168 = vadd.f32 %v1975, %v2167
    %2169 = vmatprep.mubr.bf16.mxu0 %v830
    %2170 = vmatmul.mubr.bf16.gmra.mrb[0].mxu0 %v829
    %v2171 = vpop.f32.mrb[0].mxu0
    %v2172 = vadd.f32 %v1979, %v2171
    %v2173 = vpop.f32.mrb[0].mxu0
    %v2174 = vadd.f32 %v1981, %v2173
    %v2175 = vpop.f32.mrb[0].mxu0
    %v2176 = vadd.f32 %v1983, %v2175
    %v2177 = vpop.f32.mrb[0].mxu0
    %v2178 = vadd.f32 %v1985, %v2177
    %2179 = vdwg.mxu0
    %2180 = vmatprep.subr.bf16.mxu0 %v1442
    %2181 = vmatpush1.bf16.msra.mxu0 %v1441
    %2182 = vmatprep.subr.bf16.mxu0 %v1444
    %2183 = vmatpush1.bf16.msra.mxu0 %v1443
    %2184 = vmatprep.subr.bf16.mxu0 %v1446
    %2185 = vmatpush1.bf16.msra.mxu0 %v1445
    %2186 = vmatprep.subr.bf16.mxu0 %v1448
    %2187 = vmatpush1.bf16.msra.mxu0 %v1447
    %2188 = vmatprep.subr.bf16.mxu0 %v1450
    %2189 = vmatpush1.bf16.msra.mxu0 %v1449
    %2190 = vmatprep.subr.bf16.mxu0 %v1452
    %2191 = vmatpush1.bf16.msra.mxu0 %v1451
    %2192 = vmatprep.subr.bf16.mxu0 %v1454
    %2193 = vmatpush1.bf16.msra.mxu0 %v1453
    %2194 = vmatprep.subr.bf16.mxu0 %v1456
    %2195 = vmatpush1.bf16.msra.mxu0 %v1455
    %2196 = vmatprep.subr.bf16.mxu0 %v1458
    %2197 = vmatpush1.bf16.msra.mxu0 %v1457
    %2198 = vmatprep.subr.bf16.mxu0 %v1460
    %2199 = vmatpush1.bf16.msra.mxu0 %v1459
    %2200 = vmatprep.subr.bf16.mxu0 %v1462
    %2201 = vmatpush1.bf16.msra.mxu0 %v1461
    %2202 = vmatprep.subr.bf16.mxu0 %v1464
    %2203 = vmatpush1.bf16.msra.mxu0 %v1463
    %2204 = vmatprep.subr.bf16.mxu0 %v1466
    %2205 = vmatpush1.bf16.msra.mxu0 %v1465
    %2206 = vmatprep.subr.bf16.mxu0 %v1468
    %2207 = vmatpush1.bf16.msra.mxu0 %v1467
    %2208 = vmatprep.subr.bf16.mxu0 %v1470
    %2209 = vmatpush1.bf16.msra.mxu0 %v1469
    %2210 = vmatprep.subr.bf16.mxu0 %v1472
    %2211 = vmatpush1.bf16.msra.mxu0 %v1471
    %2212 = vmatprep.mubr.bf16.mxu0 %v712
    %2213 = vmatmul.mubr.bf16.gmra.mrb[0].mxu0 %v711
    %v2214 = vpop.f32.mrb[0].mxu0
    %v2215 = vadd.f32 %v2022, %v2214
    %v2216 = vpop.f32.mrb[0].mxu0
    %v2217 = vadd.f32 %v2024, %v2216
    %v2218 = vpop.f32.mrb[0].mxu0
    %v2219 = vadd.f32 %v2026, %v2218
    %v2220 = vpop.f32.mrb[0].mxu0
    %v2221 = vadd.f32 %v2028, %v2220
    %2222 = vmatprep.mubr.bf16.mxu0 %v720
    %2223 = vmatmul.mubr.bf16.gmra.mrb[0].mxu0 %v719
    %v2224 = vpop.f32.mrb[0].mxu0
    %v2225 = vadd.f32 %v2032, %v2224
    %v2226 = vpop.f32.mrb[0].mxu0
    %v2227 = vadd.f32 %v2034, %v2226
    %v2228 = vpop.f32.mrb[0].mxu0
    %v2229 = vadd.f32 %v2036, %v2228
    %v2230 = vpop.f32.mrb[0].mxu0
    %v2231 = vadd.f32 %v2038, %v2230
    %2232 = vmatprep.mubr.bf16.mxu0 %v728
    %2233 = vmatmul.mubr.bf16.gmra.mrb[0].mxu0 %v727
    %v2234 = vpop.f32.mrb[0].mxu0
    %v2235 = vadd.f32 %v2042, %v2234
    %v2236 = vpop.f32.mrb[0].mxu0
    %v2237 = vadd.f32 %v2044, %v2236
    %v2238 = vpop.f32.mrb[0].mxu0
    %v2239 = vadd.f32 %v2046, %v2238
    %v2240 = vpop.f32.mrb[0].mxu0
    %v2241 = vadd.f32 %v2048, %v2240
    %2242 = vmatprep.mubr.bf16.mxu0 %v736
    %2243 = vmatmul.mubr.bf16.gmra.mrb[0].mxu0 %v735
    %v2244 = vpop.f32.mrb[0].mxu0
    %v2245 = vadd.f32 %v2052, %v2244
    %v2246 = vpop.f32.mrb[0].mxu0
    %v2247 = vadd.f32 %v2054, %v2246
    %v2248 = vpop.f32.mrb[0].mxu0
    %v2249 = vadd.f32 %v2056, %v2248
    %v2250 = vpop.f32.mrb[0].mxu0
    %v2251 = vadd.f32 %v2058, %v2250
    %2252 = vmatprep.mubr.bf16.mxu0 %v744
    %2253 = vmatmul.mubr.bf16.gmra.mrb[0].mxu0 %v743
    %v2254 = vpop.f32.mrb[0].mxu0
    %v2255 = vadd.f32 %v2062, %v2254
    %v2256 = vpop.f32.mrb[0].mxu0
    %v2257 = vadd.f32 %v2064, %v2256
    %v2258 = vpop.f32.mrb[0].mxu0
    %v2259 = vadd.f32 %v2066, %v2258
    %v2260 = vpop.f32.mrb[0].mxu0
    %v2261 = vadd.f32 %v2068, %v2260
    %2262 = vmatprep.mubr.bf16.mxu0 %v752
    %2263 = vmatmul.mubr.bf16.gmra.mrb[0].mxu0 %v751
    %v2264 = vpop.f32.mrb[0].mxu0
    %v2265 = vadd.f32 %v2072, %v2264
    %v2266 = vpop.f32.mrb[0].mxu0
    %v2267 = vadd.f32 %v2074, %v2266
    %v2268 = vpop.f32.mrb[0].mxu0
    %v2269 = vadd.f32 %v2076, %v2268
    %v2270 = vpop.f32.mrb[0].mxu0
    %v2271 = vadd.f32 %v2078, %v2270
    %2272 = vmatprep.mubr.bf16.mxu0 %v760
    %2273 = vmatmul.mubr.bf16.gmra.mrb[0].mxu0 %v759
    %v2274 = vpop.f32.mrb[0].mxu0
    %v2275 = vadd.f32 %v2082, %v2274
    %v2276 = vpop.f32.mrb[0].mxu0
    %v2277 = vadd.f32 %v2084, %v2276
    %v2278 = vpop.f32.mrb[0].mxu0
    %v2279 = vadd.f32 %v2086, %v2278
    %v2280 = vpop.f32.mrb[0].mxu0
    %v2281 = vadd.f32 %v2088, %v2280
    %2282 = vmatprep.mubr.bf16.mxu0 %v768
    %2283 = vmatmul.mubr.bf16.gmra.mrb[0].mxu0 %v767
    %v2284 = vpop.f32.mrb[0].mxu0
    %v2285 = vadd.f32 %v2092, %v2284
    %v2286 = vpop.f32.mrb[0].mxu0
    %v2287 = vadd.f32 %v2094, %v2286
    %v2288 = vpop.f32.mrb[0].mxu0
    %v2289 = vadd.f32 %v2096, %v2288
    %v2290 = vpop.f32.mrb[0].mxu0
    %v2291 = vadd.f32 %v2098, %v2290
    %2292 = vmatprep.mubr.bf16.mxu0 %v776
    %2293 = vmatmul.mubr.bf16.gmra.mrb[0].mxu0 %v775
    %v2294 = vpop.f32.mrb[0].mxu0
    %v2295 = vadd.f32 %v2102, %v2294
    %v2296 = vpop.f32.mrb[0].mxu0
    %v2297 = vadd.f32 %v2104, %v2296
    %v2298 = vpop.f32.mrb[0].mxu0
    %v2299 = vadd.f32 %v2106, %v2298
    %v2300 = vpop.f32.mrb[0].mxu0
    %v2301 = vadd.f32 %v2108, %v2300
    %2302 = vmatprep.mubr.bf16.mxu0 %v784
    %2303 = vmatmul.mubr.bf16.gmra.mrb[0].mxu0 %v783
    %v2304 = vpop.f32.mrb[0].mxu0
    %v2305 = vadd.f32 %v2112, %v2304
    %v2306 = vpop.f32.mrb[0].mxu0
    %v2307 = vadd.f32 %v2114, %v2306
    %v2308 = vpop.f32.mrb[0].mxu0
    %v2309 = vadd.f32 %v2116, %v2308
    %v2310 = vpop.f32.mrb[0].mxu0
    %v2311 = vadd.f32 %v2118, %v2310
    %2312 = vmatprep.mubr.bf16.mxu0 %v792
    %2313 = vmatmul.mubr.bf16.gmra.mrb[0].mxu0 %v791
    %v2314 = vpop.f32.mrb[0].mxu0
    %v2315 = vadd.f32 %v2122, %v2314
    %v2316 = vpop.f32.mrb[0].mxu0
    %v2317 = vadd.f32 %v2124, %v2316
    %v2318 = vpop.f32.mrb[0].mxu0
    %v2319 = vadd.f32 %v2126, %v2318
    %v2320 = vpop.f32.mrb[0].mxu0
    %v2321 = vadd.f32 %v2128, %v2320
    %2322 = vmatprep.mubr.bf16.mxu0 %v800
    %2323 = vmatmul.mubr.bf16.gmra.mrb[0].mxu0 %v799
    %v2324 = vpop.f32.mrb[0].mxu0
    %v2325 = vadd.f32 %v2132, %v2324
    %v2326 = vpop.f32.mrb[0].mxu0
    %v2327 = vadd.f32 %v2134, %v2326
    %v2328 = vpop.f32.mrb[0].mxu0
    %v2329 = vadd.f32 %v2136, %v2328
    %v2330 = vpop.f32.mrb[0].mxu0
    %v2331 = vadd.f32 %v2138, %v2330
    %2332 = vmatprep.mubr.bf16.mxu0 %v808
    %2333 = vmatmul.mubr.bf16.gmra.mrb[0].mxu0 %v807
    %v2334 = vpop.f32.mrb[0].mxu0
    %v2335 = vadd.f32 %v2142, %v2334
    %v2336 = vpop.f32.mrb[0].mxu0
    %v2337 = vadd.f32 %v2144, %v2336
    %v2338 = vpop.f32.mrb[0].mxu0
    %v2339 = vadd.f32 %v2146, %v2338
    %v2340 = vpop.f32.mrb[0].mxu0
    %v2341 = vadd.f32 %v2148, %v2340
    %2342 = vmatprep.mubr.bf16.mxu0 %v816
    %2343 = vmatmul.mubr.bf16.gmra.mrb[0].mxu0 %v815
    %v2344 = vpop.f32.mrb[0].mxu0
    %v2345 = vadd.f32 %v2152, %v2344
    %v2346 = vpop.f32.mrb[0].mxu0
    %v2347 = vadd.f32 %v2154, %v2346
    %v2348 = vpop.f32.mrb[0].mxu0
    %v2349 = vadd.f32 %v2156, %v2348
    %v2350 = vpop.f32.mrb[0].mxu0
    %v2351 = vadd.f32 %v2158, %v2350
    %2352 = vmatprep.mubr.bf16.mxu0 %v824
    %2353 = vmatmul.mubr.bf16.gmra.mrb[0].mxu0 %v823
    %v2354 = vpop.f32.mrb[0].mxu0
    %v2355 = vadd.f32 %v2162, %v2354
    %v2356 = vpop.f32.mrb[0].mxu0
    %v2357 = vadd.f32 %v2164, %v2356
    %v2358 = vpop.f32.mrb[0].mxu0
    %v2359 = vadd.f32 %v2166, %v2358
    %v2360 = vpop.f32.mrb[0].mxu0
    %v2361 = vadd.f32 %v2168, %v2360
    %2362 = vmatprep.mubr.bf16.mxu0 %v832
    %2363 = vmatmul.mubr.bf16.gmra.mrb[0].mxu0 %v831
    %v2364 = vpop.f32.mrb[0].mxu0
    %v2365 = vadd.f32 %v2172, %v2364
    %v2366 = vpop.f32.mrb[0].mxu0
    %v2367 = vadd.f32 %v2174, %v2366
    %v2368 = vpop.f32.mrb[0].mxu0
    %v2369 = vadd.f32 %v2176, %v2368
    %v2370 = vpop.f32.mrb[0].mxu0
    %v2371 = vadd.f32 %v2178, %v2370
    %2372 = vdwg.mxu0
    %v2373 = vmax.f32 %v2215, 0.0
    %v2374 = vmax.f32 %v2217, 0.0
    %v2375 = vmax.f32 %v2219, 0.0
    %v2376 = vmax.f32 %v2221, 0.0
    %v2377 = vmax.f32 %v2225, 0.0
    %v2378 = vmax.f32 %v2227, 0.0
    %v2379 = vmax.f32 %v2229, 0.0
    %v2380 = vmax.f32 %v2231, 0.0
    %v2381 = vmax.f32 %v2235, 0.0
    %v2382 = vmax.f32 %v2237, 0.0
    %v2383 = vmax.f32 %v2239, 0.0
    %v2384 = vmax.f32 %v2241, 0.0
    %v2385 = vmax.f32 %v2245, 0.0
    %v2386 = vmax.f32 %v2247, 0.0
    %v2387 = vmax.f32 %v2249, 0.0
    %v2388 = vmax.f32 %v2251, 0.0
    %v2389 = vmax.f32 %v2255, 0.0
    %v2390 = vmax.f32 %v2257, 0.0
    %v2391 = vmax.f32 %v2259, 0.0
    %v2392 = vmax.f32 %v2261, 0.0
    %v2393 = vmax.f32 %v2265, 0.0
    %v2394 = vmax.f32 %v2267, 0.0
    %v2395 = vmax.f32 %v2269, 0.0
    %v2396 = vmax.f32 %v2271, 0.0
    %v2397 = vmax.f32 %v2275, 0.0
    %v2398 = vmax.f32 %v2277, 0.0
    %v2399 = vmax.f32 %v2279, 0.0
    %v2400 = vmax.f32 %v2281, 0.0
    %v2401 = vmax.f32 %v2285, 0.0
    %v2402 = vmax.f32 %v2287, 0.0
    %v2403 = vmax.f32 %v2289, 0.0
    %v2404 = vmax.f32 %v2291, 0.0
    %v2405 = vmax.f32 %v2295, 0.0
    %v2406 = vmax.f32 %v2297, 0.0
    %v2407 = vmax.f32 %v2299, 0.0
    %v2408 = vmax.f32 %v2301, 0.0
    %v2409 = vmax.f32 %v2305, 0.0
    %v2410 = vmax.f32 %v2307, 0.0
    %v2411 = vmax.f32 %v2309, 0.0
    %v2412 = vmax.f32 %v2311, 0.0
    %v2413 = vmax.f32 %v2315, 0.0
    %v2414 = vmax.f32 %v2317, 0.0
    %v2415 = vmax.f32 %v2319, 0.0
    %v2416 = vmax.f32 %v2321, 0.0
    %v2417 = vmax.f32 %v2325, 0.0
    %v2418 = vmax.f32 %v2327, 0.0
    %v2419 = vmax.f32 %v2329, 0.0
    %v2420 = vmax.f32 %v2331, 0.0
    %v2421 = vmax.f32 %v2335, 0.0
    %v2422 = vmax.f32 %v2337, 0.0
    %v2423 = vmax.f32 %v2339, 0.0
    %v2424 = vmax.f32 %v2341, 0.0
    %v2425 = vmax.f32 %v2345, 0.0
    %v2426 = vmax.f32 %v2347, 0.0
    %v2427 = vmax.f32 %v2349, 0.0
    %v2428 = vmax.f32 %v2351, 0.0
    %v2429 = vmax.f32 %v2355, 0.0
    %v2430 = vmax.f32 %v2357, 0.0
    %v2431 = vmax.f32 %v2359, 0.0
    %v2432 = vmax.f32 %v2361, 0.0
    %v2433 = vmax.f32 %v2365, 0.0
    %v2434 = vmax.f32 %v2367, 0.0
    %v2435 = vmax.f32 %v2369, 0.0
    %v2436 = vmax.f32 %v2371, 0.0
    %v2437 = vpack.c.bf16 %v2375, %v2373
    %v2438 = vpack.c.bf16 %v2376, %v2374
    %v2439 = vpack.c.bf16 %v2379, %v2377
    %v2440 = vpack.c.bf16 %v2380, %v2378
    %v2441 = vpack.c.bf16 %v2383, %v2381
    %v2442 = vpack.c.bf16 %v2384, %v2382
    %v2443 = vpack.c.bf16 %v2387, %v2385
    %v2444 = vpack.c.bf16 %v2388, %v2386
    %v2445 = vpack.c.bf16 %v2391, %v2389
    %v2446 = vpack.c.bf16 %v2392, %v2390
    %v2447 = vpack.c.bf16 %v2395, %v2393
    %v2448 = vpack.c.bf16 %v2396, %v2394
    %v2449 = vpack.c.bf16 %v2399, %v2397
    %v2450 = vpack.c.bf16 %v2400, %v2398
    %v2451 = vpack.c.bf16 %v2403, %v2401
    %v2452 = vpack.c.bf16 %v2404, %v2402
    %v2453 = vpack.c.bf16 %v2407, %v2405
    %v2454 = vpack.c.bf16 %v2408, %v2406
    %v2455 = vpack.c.bf16 %v2411, %v2409
    %v2456 = vpack.c.bf16 %v2412, %v2410
    %v2457 = vpack.c.bf16 %v2415, %v2413
    %v2458 = vpack.c.bf16 %v2416, %v2414
    %v2459 = vpack.c.bf16 %v2419, %v2417
    %v2460 = vpack.c.bf16 %v2420, %v2418
    %v2461 = vpack.c.bf16 %v2423, %v2421
    %v2462 = vpack.c.bf16 %v2424, %v2422
    %v2463 = vpack.c.bf16 %v2427, %v2425
    %v2464 = vpack.c.bf16 %v2428, %v2426
    %v2465 = vpack.c.bf16 %v2431, %v2429
    %v2466 = vpack.c.bf16 %v2432, %v2430
    %v2467 = vpack.c.bf16 %v2435, %v2433
    %v2468 = vpack.c.bf16 %v2436, %v2434
    %v2469 = vld [vmem:[%s3] sm:$0xf]
    %v2470 = vld [vmem:[%s3 + $0x4] sm:$0xf]
    %v2471 = vld [vmem:[%s3 + $0x8] sm:$0xf]
    %v2472 = vld [vmem:[%s3 + $0xc] sm:$0xf]
    %v2473 = vld [vmem:[%s3 + $0x10] sm:$0xf]
    %v2474 = vld [vmem:[%s3 + $0x14] sm:$0xf]
    %v2475 = vld [vmem:[%s3 + $0x18] sm:$0xf]
    %v2476 = vld [vmem:[%s3 + $0x1c] sm:$0xf]
    %v2477 = vld [vmem:[%s3 + $0x20] sm:$0xf]
    %v2478 = vld [vmem:[%s3 + $0x24] sm:$0xf]
    %v2479 = vld [vmem:[%s3 + $0x28] sm:$0xf]
    %v2480 = vld [vmem:[%s3 + $0x2c] sm:$0xf]
    %v2481 = vld [vmem:[%s3 + $0x30] sm:$0xf]
    %v2482 = vld [vmem:[%s3 + $0x34] sm:$0xf]
    %v2483 = vld [vmem:[%s3 + $0x38] sm:$0xf]
    %v2484 = vld [vmem:[%s3 + $0x3c] sm:$0xf]
    %v2485 = vld [vmem:[%s3 + $0x40] sm:$0xf]
    %v2486 = vld [vmem:[%s3 + $0x44] sm:$0xf]
    %v2487 = vld [vmem:[%s3 + $0x48] sm:$0xf]
    %v2488 = vld [vmem:[%s3 + $0x4c] sm:$0xf]
    %v2489 = vld [vmem:[%s3 + $0x50] sm:$0xf]
    %v2490 = vld [vmem:[%s3 + $0x54] sm:$0xf]
    %v2491 = vld [vmem:[%s3 + $0x58] sm:$0xf]
    %v2492 = vld [vmem:[%s3 + $0x5c] sm:$0xf]
    %v2493 = vld [vmem:[%s3 + $0x60] sm:$0xf]
    %v2494 = vld [vmem:[%s3 + $0x64] sm:$0xf]
    %v2495 = vld [vmem:[%s3 + $0x68] sm:$0xf]
    %v2496 = vld [vmem:[%s3 + $0x6c] sm:$0xf]
    %v2497 = vld [vmem:[%s3 + $0x70] sm:$0xf]
    %v2498 = vld [vmem:[%s3 + $0x74] sm:$0xf]
    %v2499 = vld [vmem:[%s3 + $0x78] sm:$0xf]
    %v2500 = vld [vmem:[%s3 + $0x7c] sm:$0xf]
    %v2501 = vld [vmem:[%s4] sm:$0x1]
    %v2503 = vlaneseq
    %v2504 = vshrl.u32 %v2503, 7
    %v2505 = vsub.s32 0, %v2504
    %v2506 = vrot.slane %v2501, %v2505
    %v2540 = vunpack.c.l.b16 %v2469
    %v2541 = vunpack.c.l.b16 %v2470
    %v2542 = vunpack.c.l.b16 %v2471
    %v2543 = vunpack.c.l.b16 %v2472
    %v2544 = vunpack.c.l.b16 %v2473
    %v2545 = vunpack.c.l.b16 %v2474
    %v2546 = vunpack.c.l.b16 %v2475
    %v2547 = vunpack.c.l.b16 %v2476
    %v2548 = vunpack.c.l.b16 %v2477
    %v2549 = vunpack.c.l.b16 %v2478
    %v2550 = vunpack.c.l.b16 %v2479
    %v2551 = vunpack.c.l.b16 %v2480
    %v2552 = vunpack.c.l.b16 %v2481
    %v2553 = vunpack.c.l.b16 %v2482
    %v2554 = vunpack.c.l.b16 %v2483
    %v2555 = vunpack.c.l.b16 %v2484
    %v2556 = vunpack.c.l.b16 %v2485
    %v2557 = vunpack.c.l.b16 %v2486
    %v2558 = vunpack.c.l.b16 %v2487
    %v2559 = vunpack.c.l.b16 %v2488
    %v2560 = vunpack.c.l.b16 %v2489
    %v2561 = vunpack.c.l.b16 %v2490
    %v2562 = vunpack.c.l.b16 %v2491
    %v2563 = vunpack.c.l.b16 %v2492
    %v2564 = vunpack.c.l.b16 %v2493
    %v2565 = vunpack.c.l.b16 %v2494
    %v2566 = vunpack.c.l.b16 %v2495
    %v2567 = vunpack.c.l.b16 %v2496
    %v2568 = vunpack.c.l.b16 %v2497
    %v2569 = vunpack.c.l.b16 %v2498
    %v2570 = vunpack.c.l.b16 %v2499
    %v2571 = vunpack.c.l.b16 %v2500
    %v2572 = vpack.c.b16 %v2541, %v2540
    %v2573 = vpack.c.b16 %v2543, %v2542
    %v2574 = vpack.c.b16 %v2545, %v2544
    %v2575 = vpack.c.b16 %v2547, %v2546
    %v2576 = vpack.c.b16 %v2549, %v2548
    %v2577 = vpack.c.b16 %v2551, %v2550
    %v2578 = vpack.c.b16 %v2553, %v2552
    %v2579 = vpack.c.b16 %v2555, %v2554
    %v2580 = vpack.c.b16 %v2557, %v2556
    %v2581 = vpack.c.b16 %v2559, %v2558
    %v2582 = vpack.c.b16 %v2561, %v2560
    %v2583 = vpack.c.b16 %v2563, %v2562
    %v2584 = vpack.c.b16 %v2565, %v2564
    %v2585 = vpack.c.b16 %v2567, %v2566
    %v2586 = vpack.c.b16 %v2569, %v2568
    %v2587 = vpack.c.b16 %v2571, %v2570
    %2604 = vmatprep.subr.bf16.mxu0 0
    %2605 = vmatpush1.bf16.msra.mxu0 %v2572
    %2606 = vmatprep.subr.bf16.mxu0 0
    %2607 = vmatpush1.bf16.msra.mxu0 %v2573
    %2608 = vmatprep.subr.bf16.mxu0 0
    %2609 = vmatpush1.bf16.msra.mxu0 %v2574
    %2610 = vmatprep.subr.bf16.mxu0 0
    %2611 = vmatpush1.bf16.msra.mxu0 %v2575
    %2612 = vmatprep.subr.bf16.mxu0 0
    %2613 = vmatpush1.bf16.msra.mxu0 %v2576
    %2614 = vmatprep.subr.bf16.mxu0 0
    %2615 = vmatpush1.bf16.msra.mxu0 %v2577
    %2616 = vmatprep.subr.bf16.mxu0 0
    %2617 = vmatpush1.bf16.msra.mxu0 %v2578
    %2618 = vmatprep.subr.bf16.mxu0 0
    %2619 = vmatpush1.bf16.msra.mxu0 %v2579
    %2620 = vmatprep.subr.bf16.mxu0 0
    %2621 = vmatpush1.bf16.msra.mxu0 %v2580
    %2622 = vmatprep.subr.bf16.mxu0 0
    %2623 = vmatpush1.bf16.msra.mxu0 %v2581
    %2624 = vmatprep.subr.bf16.mxu0 0
    %2625 = vmatpush1.bf16.msra.mxu0 %v2582
    %2626 = vmatprep.subr.bf16.mxu0 0
    %2627 = vmatpush1.bf16.msra.mxu0 %v2583
    %2628 = vmatprep.subr.bf16.mxu0 0
    %2629 = vmatpush1.bf16.msra.mxu0 %v2584
    %2630 = vmatprep.subr.bf16.mxu0 0
    %2631 = vmatpush1.bf16.msra.mxu0 %v2585
    %2632 = vmatprep.subr.bf16.mxu0 0
    %2633 = vmatpush1.bf16.msra.mxu0 %v2586
    %2634 = vmatprep.subr.bf16.mxu0 0
    %2635 = vmatpush1.bf16.msra.mxu0 %v2587
    %2636 = vmatprep.mubr.bf16.mxu0 %v2438
    %2637 = vmatmul.mubr.bf16.gmra.mrb[0].mxu0 %v2437
    %v2638 = vpop.f32.mrb[0].mxu0
    %v2639 = vadd.f32 %v2506, %v2638
    %v2640 = vpop.f32.mrb[0].mxu0
    %v2641 = vpop.f32.mrb[0].mxu0
    %v2642 = vadd.f32 %v2506, %v2641
    %v2643 = vpop.f32.mrb[0].mxu0
    %2644 = vmatprep.mubr.bf16.mxu0 %v2440
    %2645 = vmatmul.mubr.bf16.gmra.mrb[0].mxu0 %v2439
    %v2646 = vpop.f32.mrb[0].mxu0
    %v2647 = vadd.f32 %v2506, %v2646
    %v2648 = vpop.f32.mrb[0].mxu0
    %v2649 = vpop.f32.mrb[0].mxu0
    %v2650 = vadd.f32 %v2506, %v2649
    %v2651 = vpop.f32.mrb[0].mxu0
    %2652 = vmatprep.mubr.bf16.mxu0 %v2442
    %2653 = vmatmul.mubr.bf16.gmra.mrb[0].mxu0 %v2441
    %v2654 = vpop.f32.mrb[0].mxu0
    %v2655 = vadd.f32 %v2506, %v2654
    %v2656 = vpop.f32.mrb[0].mxu0
    %v2657 = vpop.f32.mrb[0].mxu0
    %v2658 = vadd.f32 %v2506, %v2657
    %v2659 = vpop.f32.mrb[0].mxu0
    %2660 = vmatprep.mubr.bf16.mxu0 %v2444
    %2661 = vmatmul.mubr.bf16.gmra.mrb[0].mxu0 %v2443
    %v2662 = vpop.f32.mrb[0].mxu0
    %v2663 = vadd.f32 %v2506, %v2662
    %v2664 = vpop.f32.mrb[0].mxu0
    %v2665 = vpop.f32.mrb[0].mxu0
    %v2666 = vadd.f32 %v2506, %v2665
    %v2667 = vpop.f32.mrb[0].mxu0
    %2668 = vmatprep.mubr.bf16.mxu0 %v2446
    %2669 = vmatmul.mubr.bf16.gmra.mrb[0].mxu0 %v2445
    %v2670 = vpop.f32.mrb[0].mxu0
    %v2671 = vadd.f32 %v2506, %v2670
    %v2672 = vpop.f32.mrb[0].mxu0
    %v2673 = vpop.f32.mrb[0].mxu0
    %v2674 = vadd.f32 %v2506, %v2673
    %v2675 = vpop.f32.mrb[0].mxu0
    %2676 = vmatprep.mubr.bf16.mxu0 %v2448
    %2677 = vmatmul.mubr.bf16.gmra.mrb[0].mxu0 %v2447
    %v2678 = vpop.f32.mrb[0].mxu0
    %v2679 = vadd.f32 %v2506, %v2678
    %v2680 = vpop.f32.mrb[0].mxu0
    %v2681 = vpop.f32.mrb[0].mxu0
    %v2682 = vadd.f32 %v2506, %v2681
    %v2683 = vpop.f32.mrb[0].mxu0
    %2684 = vmatprep.mubr.bf16.mxu0 %v2450
    %2685 = vmatmul.mubr.bf16.gmra.mrb[0].mxu0 %v2449
    %v2686 = vpop.f32.mrb[0].mxu0
    %v2687 = vadd.f32 %v2506, %v2686
    %v2688 = vpop.f32.mrb[0].mxu0
    %v2689 = vpop.f32.mrb[0].mxu0
    %v2690 = vadd.f32 %v2506, %v2689
    %v2691 = vpop.f32.mrb[0].mxu0
    %2692 = vmatprep.mubr.bf16.mxu0 %v2452
    %2693 = vmatmul.mubr.bf16.gmra.mrb[0].mxu0 %v2451
    %v2694 = vpop.f32.mrb[0].mxu0
    %v2695 = vadd.f32 %v2506, %v2694
    %v2696 = vpop.f32.mrb[0].mxu0
    %v2697 = vpop.f32.mrb[0].mxu0
    %v2698 = vadd.f32 %v2506, %v2697
    %v2699 = vpop.f32.mrb[0].mxu0
    %2700 = vmatprep.mubr.bf16.mxu0 %v2454
    %2701 = vmatmul.mubr.bf16.gmra.mrb[0].mxu0 %v2453
    %v2702 = vpop.f32.mrb[0].mxu0
    %v2703 = vadd.f32 %v2506, %v2702
    %v2704 = vpop.f32.mrb[0].mxu0
    %v2705 = vpop.f32.mrb[0].mxu0
    %v2706 = vadd.f32 %v2506, %v2705
    %v2707 = vpop.f32.mrb[0].mxu0
    %2708 = vmatprep.mubr.bf16.mxu0 %v2456
    %2709 = vmatmul.mubr.bf16.gmra.mrb[0].mxu0 %v2455
    %v2710 = vpop.f32.mrb[0].mxu0
    %v2711 = vadd.f32 %v2506, %v2710
    %v2712 = vpop.f32.mrb[0].mxu0
    %v2713 = vpop.f32.mrb[0].mxu0
    %v2714 = vadd.f32 %v2506, %v2713
    %v2715 = vpop.f32.mrb[0].mxu0
    %2716 = vmatprep.mubr.bf16.mxu0 %v2458
    %2717 = vmatmul.mubr.bf16.gmra.mrb[0].mxu0 %v2457
    %v2718 = vpop.f32.mrb[0].mxu0
    %v2719 = vadd.f32 %v2506, %v2718
    %v2720 = vpop.f32.mrb[0].mxu0
    %v2721 = vpop.f32.mrb[0].mxu0
    %v2722 = vadd.f32 %v2506, %v2721
    %v2723 = vpop.f32.mrb[0].mxu0
    %2724 = vmatprep.mubr.bf16.mxu0 %v2460
    %2725 = vmatmul.mubr.bf16.gmra.mrb[0].mxu0 %v2459
    %v2726 = vpop.f32.mrb[0].mxu0
    %v2727 = vadd.f32 %v2506, %v2726
    %v2728 = vpop.f32.mrb[0].mxu0
    %v2729 = vpop.f32.mrb[0].mxu0
    %v2730 = vadd.f32 %v2506, %v2729
    %v2731 = vpop.f32.mrb[0].mxu0
    %2732 = vmatprep.mubr.bf16.mxu0 %v2462
    %2733 = vmatmul.mubr.bf16.gmra.mrb[0].mxu0 %v2461
    %v2734 = vpop.f32.mrb[0].mxu0
    %v2735 = vadd.f32 %v2506, %v2734
    %v2736 = vpop.f32.mrb[0].mxu0
    %v2737 = vpop.f32.mrb[0].mxu0
    %v2738 = vadd.f32 %v2506, %v2737
    %v2739 = vpop.f32.mrb[0].mxu0
    %2740 = vmatprep.mubr.bf16.mxu0 %v2464
    %2741 = vmatmul.mubr.bf16.gmra.mrb[0].mxu0 %v2463
    %v2742 = vpop.f32.mrb[0].mxu0
    %v2743 = vadd.f32 %v2506, %v2742
    %v2744 = vpop.f32.mrb[0].mxu0
    %v2745 = vpop.f32.mrb[0].mxu0
    %v2746 = vadd.f32 %v2506, %v2745
    %v2747 = vpop.f32.mrb[0].mxu0
    %2748 = vmatprep.mubr.bf16.mxu0 %v2466
    %2749 = vmatmul.mubr.bf16.gmra.mrb[0].mxu0 %v2465
    %v2750 = vpop.f32.mrb[0].mxu0
    %v2751 = vadd.f32 %v2506, %v2750
    %v2752 = vpop.f32.mrb[0].mxu0
    %v2753 = vpop.f32.mrb[0].mxu0
    %v2754 = vadd.f32 %v2506, %v2753
    %v2755 = vpop.f32.mrb[0].mxu0
    %2756 = vmatprep.mubr.bf16.mxu0 %v2468
    %2757 = vmatmul.mubr.bf16.gmra.mrb[0].mxu0 %v2467
    %v2758 = vpop.f32.mrb[0].mxu0
    %v2759 = vadd.f32 %v2506, %v2758
    %v2760 = vpop.f32.mrb[0].mxu0
    %v2761 = vpop.f32.mrb[0].mxu0
    %v2762 = vadd.f32 %v2506, %v2761
    %v2763 = vpop.f32.mrb[0].mxu0
    %2764 = vdwg.mxu0
    %v2765 = vmul.f32 %v2639, 1.442695
    %v2766 = vpow.pop %v2765
    %v2767 = vmul.f32 %v2642, 1.442695
    %v2768 = vpow.pop %v2767
    %v2769 = vmul.f32 %v2647, 1.442695
    %v2770 = vpow.pop %v2769
    %v2771 = vmul.f32 %v2650, 1.442695
    %v2772 = vpow.pop %v2771
    %v2773 = vmul.f32 %v2655, 1.442695
    %v2774 = vpow.pop %v2773
    %v2775 = vmul.f32 %v2658, 1.442695
    %v2776 = vpow.pop %v2775
    %v2777 = vmul.f32 %v2663, 1.442695
    %v2778 = vpow.pop %v2777
    %v2779 = vmul.f32 %v2666, 1.442695
    %v2780 = vpow.pop %v2779
    %v2781 = vmul.f32 %v2671, 1.442695
    %v2782 = vpow.pop %v2781
    %v2783 = vmul.f32 %v2674, 1.442695
    %v2784 = vpow.pop %v2783
    %v2785 = vmul.f32 %v2679, 1.442695
    %v2786 = vpow.pop %v2785
    %v2787 = vmul.f32 %v2682, 1.442695
    %v2788 = vpow.pop %v2787
    %v2789 = vmul.f32 %v2687, 1.442695
    %v2790 = vpow.pop %v2789
    %v2791 = vmul.f32 %v2690, 1.442695
    %v2792 = vpow.pop %v2791
    %v2793 = vmul.f32 %v2695, 1.442695
    %v2794 = vpow.pop %v2793
    %v2795 = vmul.f32 %v2698, 1.442695
    %v2796 = vpow.pop %v2795
    %v2797 = vmul.f32 %v2703, 1.442695
    %v2798 = vpow.pop %v2797
    %v2799 = vmul.f32 %v2706, 1.442695
    %v2800 = vpow.pop %v2799
    %v2801 = vmul.f32 %v2711, 1.442695
    %v2802 = vpow.pop %v2801
    %v2803 = vmul.f32 %v2714, 1.442695
    %v2804 = vpow.pop %v2803
    %v2805 = vmul.f32 %v2719, 1.442695
    %v2806 = vpow.pop %v2805
    %v2807 = vmul.f32 %v2722, 1.442695
    %v2808 = vpow.pop %v2807
    %v2809 = vmul.f32 %v2727, 1.442695
    %v2810 = vpow.pop %v2809
    %v2811 = vmul.f32 %v2730, 1.442695
    %v2812 = vpow.pop %v2811
    %v2813 = vmul.f32 %v2735, 1.442695
    %v2814 = vpow.pop %v2813
    %v2815 = vmul.f32 %v2738, 1.442695
    %v2816 = vpow.pop %v2815
    %v2817 = vmul.f32 %v2743, 1.442695
    %v2818 = vpow.pop %v2817
    %v2819 = vmul.f32 %v2746, 1.442695
    %v2820 = vpow.pop %v2819
    %v2821 = vmul.f32 %v2751, 1.442695
    %v2822 = vpow.pop %v2821
    %v2823 = vmul.f32 %v2754, 1.442695
    %v2824 = vpow.pop %v2823
    %v2825 = vmul.f32 %v2759, 1.442695
    %v2826 = vpow.pop %v2825
    %v2827 = vmul.f32 %v2762, 1.442695
    %v2828 = vpow.pop %v2827
    %v2829 = vld [vmem:[%s5] sm:$0xff]
    %v2830 = vld [vmem:[%s5 + $0x8] sm:$0xff]
    %v2831 = vld [vmem:[%s5 + $0x10] sm:$0xff]
    %v2832 = vld [vmem:[%s5 + $0x18] sm:$0xff]
    %v2833 = vld [vmem:[%s5 + $0x20] sm:$0xff]
    %v2834 = vld [vmem:[%s5 + $0x28] sm:$0xff]
    %v2835 = vld [vmem:[%s5 + $0x30] sm:$0xff]
    %v2836 = vld [vmem:[%s5 + $0x38] sm:$0xff]
    %v2837 = vld [vmem:[%s5 + $0x40] sm:$0xff]
    %v2838 = vld [vmem:[%s5 + $0x48] sm:$0xff]
    %v2839 = vld [vmem:[%s5 + $0x50] sm:$0xff]
    %v2840 = vld [vmem:[%s5 + $0x58] sm:$0xff]
    %v2841 = vld [vmem:[%s5 + $0x60] sm:$0xff]
    %v2842 = vld [vmem:[%s5 + $0x68] sm:$0xff]
    %v2843 = vld [vmem:[%s5 + $0x70] sm:$0xff]
    %v2844 = vld [vmem:[%s5 + $0x78] sm:$0xff]
    %v2845 = vld [vmem:[%s5 + $0x80] sm:$0xff]
    %v2846 = vld [vmem:[%s5 + $0x88] sm:$0xff]
    %v2847 = vld [vmem:[%s5 + $0x90] sm:$0xff]
    %v2848 = vld [vmem:[%s5 + $0x98] sm:$0xff]
    %v2849 = vld [vmem:[%s5 + $0xa0] sm:$0xff]
    %v2850 = vld [vmem:[%s5 + $0xa8] sm:$0xff]
    %v2851 = vld [vmem:[%s5 + $0xb0] sm:$0xff]
    %v2852 = vld [vmem:[%s5 + $0xb8] sm:$0xff]
    %v2853 = vld [vmem:[%s5 + $0xc0] sm:$0xff]
    %v2854 = vld [vmem:[%s5 + $0xc8] sm:$0xff]
    %v2855 = vld [vmem:[%s5 + $0xd0] sm:$0xff]
    %v2856 = vld [vmem:[%s5 + $0xd8] sm:$0xff]
    %v2857 = vld [vmem:[%s5 + $0xe0] sm:$0xff]
    %v2858 = vld [vmem:[%s5 + $0xe8] sm:$0xff]
    %v2859 = vld [vmem:[%s5 + $0xf0] sm:$0xff]
    %v2860 = vld [vmem:[%s5 + $0xf8] sm:$0xff]
    %2893 = vrot.lane.b32.xlu0 %v2829, 64
    %v2894 = vpop.permute.xlu0 %2893
    %2895 = vrot.lane.b32.xlu0 %v2830, 64
    %v2896 = vpop.permute.xlu0 %2895
    %2897 = vrot.lane.b32.xlu0 %v2831, 64
    %v2898 = vpop.permute.xlu0 %2897
    %2899 = vrot.lane.b32.xlu0 %v2832, 64
    %v2900 = vpop.permute.xlu0 %2899
    %2901 = vrot.lane.b32.xlu0 %v2833, 64
    %v2902 = vpop.permute.xlu0 %2901
    %2903 = vrot.lane.b32.xlu0 %v2834, 64
    %v2904 = vpop.permute.xlu0 %2903
    %2905 = vrot.lane.b32.xlu0 %v2835, 64
    %v2906 = vpop.permute.xlu0 %2905
    %2907 = vrot.lane.b32.xlu0 %v2836, 64
    %v2908 = vpop.permute.xlu0 %2907
    %2909 = vrot.lane.b32.xlu0 %v2837, 64
    %v2910 = vpop.permute.xlu0 %2909
    %2911 = vrot.lane.b32.xlu0 %v2838, 64
    %v2912 = vpop.permute.xlu0 %2911
    %2913 = vrot.lane.b32.xlu0 %v2839, 64
    %v2914 = vpop.permute.xlu0 %2913
    %2915 = vrot.lane.b32.xlu0 %v2840, 64
    %v2916 = vpop.permute.xlu0 %2915
    %2917 = vrot.lane.b32.xlu0 %v2841, 64
    %v2918 = vpop.permute.xlu0 %2917
    %2919 = vrot.lane.b32.xlu0 %v2842, 64
    %v2920 = vpop.permute.xlu0 %2919
    %2921 = vrot.lane.b32.xlu0 %v2843, 64
    %v2922 = vpop.permute.xlu0 %2921
    %2923 = vrot.lane.b32.xlu0 %v2844, 64
    %v2924 = vpop.permute.xlu0 %2923
    %2925 = vrot.lane.b32.xlu0 %v2845, 64
    %v2926 = vpop.permute.xlu0 %2925
    %2927 = vrot.lane.b32.xlu0 %v2846, 64
    %v2928 = vpop.permute.xlu0 %2927
    %2929 = vrot.lane.b32.xlu0 %v2847, 64
    %v2930 = vpop.permute.xlu0 %2929
    %2931 = vrot.lane.b32.xlu0 %v2848, 64
    %v2932 = vpop.permute.xlu0 %2931
    %2933 = vrot.lane.b32.xlu0 %v2849, 64
    %v2934 = vpop.permute.xlu0 %2933
    %2935 = vrot.lane.b32.xlu0 %v2850, 64
    %v2936 = vpop.permute.xlu0 %2935
    %2937 = vrot.lane.b32.xlu0 %v2851, 64
    %v2938 = vpop.permute.xlu0 %2937
    %2939 = vrot.lane.b32.xlu0 %v2852, 64
    %v2940 = vpop.permute.xlu0 %2939
    %2941 = vrot.lane.b32.xlu0 %v2853, 64
    %v2942 = vpop.permute.xlu0 %2941
    %2943 = vrot.lane.b32.xlu0 %v2854, 64
    %v2944 = vpop.permute.xlu0 %2943
    %2945 = vrot.lane.b32.xlu0 %v2855, 64
    %v2946 = vpop.permute.xlu0 %2945
    %2947 = vrot.lane.b32.xlu0 %v2856, 64
    %v2948 = vpop.permute.xlu0 %2947
    %2949 = vrot.lane.b32.xlu0 %v2857, 64
    %v2950 = vpop.permute.xlu0 %2949
    %2951 = vrot.lane.b32.xlu0 %v2858, 64
    %v2952 = vpop.permute.xlu0 %2951
    %2953 = vrot.lane.b32.xlu0 %v2859, 64
    %v2954 = vpop.permute.xlu0 %2953
    %2955 = vrot.lane.b32.xlu0 %v2860, 64
    %v2956 = vpop.permute.xlu0 %2955
    %v2989 = vmul.f32 %v2766, %v2894
    %v2990 = vmul.f32 %v2768, %v2896
    %v2991 = vmul.f32 %v2770, %v2898
    %v2992 = vmul.f32 %v2772, %v2900
    %v2993 = vmul.f32 %v2774, %v2902
    %v2994 = vmul.f32 %v2776, %v2904
    %v2995 = vmul.f32 %v2778, %v2906
    %v2996 = vmul.f32 %v2780, %v2908
    %v2997 = vmul.f32 %v2782, %v2910
    %v2998 = vmul.f32 %v2784, %v2912
    %v2999 = vmul.f32 %v2786, %v2914
    %v3000 = vmul.f32 %v2788, %v2916
    %v3001 = vmul.f32 %v2790, %v2918
    %v3002 = vmul.f32 %v2792, %v2920
    %v3003 = vmul.f32 %v2794, %v2922
    %v3004 = vmul.f32 %v2796, %v2924
    %v3005 = vmul.f32 %v2798, %v2926
    %v3006 = vmul.f32 %v2800, %v2928
    %v3007 = vmul.f32 %v2802, %v2930
    %v3008 = vmul.f32 %v2804, %v2932
    %v3009 = vmul.f32 %v2806, %v2934
    %v3010 = vmul.f32 %v2808, %v2936
    %v3011 = vmul.f32 %v2810, %v2938
    %v3012 = vmul.f32 %v2812, %v2940
    %v3013 = vmul.f32 %v2814, %v2942
    %v3014 = vmul.f32 %v2816, %v2944
    %v3015 = vmul.f32 %v2818, %v2946
    %v3016 = vmul.f32 %v2820, %v2948
    %v3017 = vmul.f32 %v2822, %v2950
    %v3018 = vmul.f32 %v2824, %v2952
    %v3019 = vmul.f32 %v2826, %v2954
    %v3020 = vmul.f32 %v2828, %v2956
    %3053 = vrot.lane.b32.xlu0 %v2989, 64
    %v3054 = vpop.permute.xlu0 %3053
    %3055 = vrot.lane.b32.xlu0 %v2990, 64
    %v3056 = vpop.permute.xlu0 %3055
    %3057 = vrot.lane.b32.xlu0 %v2991, 64
    %v3058 = vpop.permute.xlu0 %3057
    %3059 = vrot.lane.b32.xlu0 %v2992, 64
    %v3060 = vpop.permute.xlu0 %3059
    %3061 = vrot.lane.b32.xlu0 %v2993, 64
    %v3062 = vpop.permute.xlu0 %3061
    %3063 = vrot.lane.b32.xlu0 %v2994, 64
    %v3064 = vpop.permute.xlu0 %3063
    %3065 = vrot.lane.b32.xlu0 %v2995, 64
    %v3066 = vpop.permute.xlu0 %3065
    %3067 = vrot.lane.b32.xlu0 %v2996, 64
    %v3068 = vpop.permute.xlu0 %3067
    %3069 = vrot.lane.b32.xlu0 %v2997, 64
    %v3070 = vpop.permute.xlu0 %3069
    %3071 = vrot.lane.b32.xlu0 %v2998, 64
    %v3072 = vpop.permute.xlu0 %3071
    %3073 = vrot.lane.b32.xlu0 %v2999, 64
    %v3074 = vpop.permute.xlu0 %3073
    %3075 = vrot.lane.b32.xlu0 %v3000, 64
    %v3076 = vpop.permute.xlu0 %3075
    %3077 = vrot.lane.b32.xlu0 %v3001, 64
    %v3078 = vpop.permute.xlu0 %3077
    %3079 = vrot.lane.b32.xlu0 %v3002, 64
    %v3080 = vpop.permute.xlu0 %3079
    %3081 = vrot.lane.b32.xlu0 %v3003, 64
    %v3082 = vpop.permute.xlu0 %3081
    %3083 = vrot.lane.b32.xlu0 %v3004, 64
    %v3084 = vpop.permute.xlu0 %3083
    %3085 = vrot.lane.b32.xlu0 %v3005, 64
    %v3086 = vpop.permute.xlu0 %3085
    %3087 = vrot.lane.b32.xlu0 %v3006, 64
    %v3088 = vpop.permute.xlu0 %3087
    %3089 = vrot.lane.b32.xlu0 %v3007, 64
    %v3090 = vpop.permute.xlu0 %3089
    %3091 = vrot.lane.b32.xlu0 %v3008, 64
    %v3092 = vpop.permute.xlu0 %3091
    %3093 = vrot.lane.b32.xlu0 %v3009, 64
    %v3094 = vpop.permute.xlu0 %3093
    %3095 = vrot.lane.b32.xlu0 %v3010, 64
    %v3096 = vpop.permute.xlu0 %3095
    %3097 = vrot.lane.b32.xlu0 %v3011, 64
    %v3098 = vpop.permute.xlu0 %3097
    %3099 = vrot.lane.b32.xlu0 %v3012, 64
    %v3100 = vpop.permute.xlu0 %3099
    %3101 = vrot.lane.b32.xlu0 %v3013, 64
    %v3102 = vpop.permute.xlu0 %3101
    %3103 = vrot.lane.b32.xlu0 %v3014, 64
    %v3104 = vpop.permute.xlu0 %3103
    %3105 = vrot.lane.b32.xlu0 %v3015, 64
    %v3106 = vpop.permute.xlu0 %3105
    %3107 = vrot.lane.b32.xlu0 %v3016, 64
    %v3108 = vpop.permute.xlu0 %3107
    %3109 = vrot.lane.b32.xlu0 %v3017, 64
    %v3110 = vpop.permute.xlu0 %3109
    %3111 = vrot.lane.b32.xlu0 %v3018, 64
    %v3112 = vpop.permute.xlu0 %3111
    %3113 = vrot.lane.b32.xlu0 %v3019, 64
    %v3114 = vpop.permute.xlu0 %3113
    %3115 = vrot.lane.b32.xlu0 %v3020, 64
    %v3116 = vpop.permute.xlu0 %3115
    %v3149 = vadd.f32 %v2639, %v3054
    %v3150 = vadd.f32 %v2642, %v3056
    %v3151 = vadd.f32 %v2647, %v3058
    %v3152 = vadd.f32 %v2650, %v3060
    %v3153 = vadd.f32 %v2655, %v3062
    %v3154 = vadd.f32 %v2658, %v3064
    %v3155 = vadd.f32 %v2663, %v3066
    %v3156 = vadd.f32 %v2666, %v3068
    %v3157 = vadd.f32 %v2671, %v3070
    %v3158 = vadd.f32 %v2674, %v3072
    %v3159 = vadd.f32 %v2679, %v3074
    %v3160 = vadd.f32 %v2682, %v3076
    %v3161 = vadd.f32 %v2687, %v3078
    %v3162 = vadd.f32 %v2690, %v3080
    %v3163 = vadd.f32 %v2695, %v3082
    %v3164 = vadd.f32 %v2698, %v3084
    %v3165 = vadd.f32 %v2703, %v3086
    %v3166 = vadd.f32 %v2706, %v3088
    %v3167 = vadd.f32 %v2711, %v3090
    %v3168 = vadd.f32 %v2714, %v3092
    %v3169 = vadd.f32 %v2719, %v3094
    %v3170 = vadd.f32 %v2722, %v3096
    %v3171 = vadd.f32 %v2727, %v3098
    %v3172 = vadd.f32 %v2730, %v3100
    %v3173 = vadd.f32 %v2735, %v3102
    %v3174 = vadd.f32 %v2738, %v3104
    %v3175 = vadd.f32 %v2743, %v3106
    %v3176 = vadd.f32 %v2746, %v3108
    %v3177 = vadd.f32 %v2751, %v3110
    %v3178 = vadd.f32 %v2754, %v3112
    %v3179 = vadd.f32 %v2759, %v3114
    %v3180 = vadd.f32 %v2762, %v3116
    %vm3181 = vcmask 523264
    %v3182 = vsel %vm3181, %v2639, %v2766
    %v3183 = vsel %vm3181, %v2642, %v2768
    %v3184 = vsel %vm3181, %v2647, %v2770
    %v3185 = vsel %vm3181, %v2650, %v2772
    %v3186 = vsel %vm3181, %v2655, %v2774
    %v3187 = vsel %vm3181, %v2658, %v2776
    %v3188 = vsel %vm3181, %v2663, %v2778
    %v3189 = vsel %vm3181, %v2666, %v2780
    %v3190 = vsel %vm3181, %v2671, %v2782
    %v3191 = vsel %vm3181, %v2674, %v2784
    %v3192 = vsel %vm3181, %v2679, %v2786
    %v3193 = vsel %vm3181, %v2682, %v2788
    %v3194 = vsel %vm3181, %v2687, %v2790
    %v3195 = vsel %vm3181, %v2690, %v2792
    %v3196 = vsel %vm3181, %v2695, %v2794
    %v3197 = vsel %vm3181, %v2698, %v2796
    %v3198 = vsel %vm3181, %v2703, %v2798
    %v3199 = vsel %vm3181, %v2706, %v2800
    %v3200 = vsel %vm3181, %v2711, %v2802
    %v3201 = vsel %vm3181, %v2714, %v2804
    %v3202 = vsel %vm3181, %v2719, %v2806
    %v3203 = vsel %vm3181, %v2722, %v2808
    %v3204 = vsel %vm3181, %v2727, %v2810
    %v3205 = vsel %vm3181, %v2730, %v2812
    %v3206 = vsel %vm3181, %v2735, %v2814
    %v3207 = vsel %vm3181, %v2738, %v2816
    %v3208 = vsel %vm3181, %v2743, %v2818
    %v3209 = vsel %vm3181, %v2746, %v2820
    %v3210 = vsel %vm3181, %v2751, %v2822
    %v3211 = vsel %vm3181, %v2754, %v2824
    %v3212 = vsel %vm3181, %v2759, %v2826
    %v3213 = vsel %vm3181, %v2762, %v2828
    %v3214 = vsel %vm3181, %v3149, 0.0
    %v3215 = vsel %vm3181, %v3150, 0.0
    %v3216 = vsel %vm3181, %v3151, 0.0
    %v3217 = vsel %vm3181, %v3152, 0.0
    %v3218 = vsel %vm3181, %v3153, 0.0
    %v3219 = vsel %vm3181, %v3154, 0.0
    %v3220 = vsel %vm3181, %v3155, 0.0
    %v3221 = vsel %vm3181, %v3156, 0.0
    %v3222 = vsel %vm3181, %v3157, 0.0
    %v3223 = vsel %vm3181, %v3158, 0.0
    %v3224 = vsel %vm3181, %v3159, 0.0
    %v3225 = vsel %vm3181, %v3160, 0.0
    %v3226 = vsel %vm3181, %v3161, 0.0
    %v3227 = vsel %vm3181, %v3162, 0.0
    %v3228 = vsel %vm3181, %v3163, 0.0
    %v3229 = vsel %vm3181, %v3164, 0.0
    %v3230 = vsel %vm3181, %v3165, 0.0
    %v3231 = vsel %vm3181, %v3166, 0.0
    %v3232 = vsel %vm3181, %v3167, 0.0
    %v3233 = vsel %vm3181, %v3168, 0.0
    %v3234 = vsel %vm3181, %v3169, 0.0
    %v3235 = vsel %vm3181, %v3170, 0.0
    %v3236 = vsel %vm3181, %v3171, 0.0
    %v3237 = vsel %vm3181, %v3172, 0.0
    %v3238 = vsel %vm3181, %v3173, 0.0
    %v3239 = vsel %vm3181, %v3174, 0.0
    %v3240 = vsel %vm3181, %v3175, 0.0
    %v3241 = vsel %vm3181, %v3176, 0.0
    %v3242 = vsel %vm3181, %v3177, 0.0
    %v3243 = vsel %vm3181, %v3178, 0.0
    %v3244 = vsel %vm3181, %v3179, 0.0
    %v3245 = vsel %vm3181, %v3180, 0.0
    %3246 = vst [vmem:[#allocation7] sm:$0xff] %v3182
    %3247 = vst [vmem:[#allocation7 + $0x8] sm:$0xff] %v3214
    %3248 = vst [vmem:[#allocation7 + $0x10] sm:$0xff] %v3183
    %3249 = vst [vmem:[#allocation7 + $0x18] sm:$0xff] %v3215
    %3250 = vst [vmem:[#allocation7 + $0x20] sm:$0xff] %v3184
    %3251 = vst [vmem:[#allocation7 + $0x28] sm:$0xff] %v3216
    %3252 = vst [vmem:[#allocation7 + $0x30] sm:$0xff] %v3185
    %3253 = vst [vmem:[#allocation7 + $0x38] sm:$0xff] %v3217
    %3254 = vst [vmem:[#allocation7 + $0x40] sm:$0xff] %v3186
    %3255 = vst [vmem:[#allocation7 + $0x48] sm:$0xff] %v3218
    %3256 = vst [vmem:[#allocation7 + $0x50] sm:$0xff] %v3187
    %3257 = vst [vmem:[#allocation7 + $0x58] sm:$0xff] %v3219
    %3258 = vst [vmem:[#allocation7 + $0x60] sm:$0xff] %v3188
    %3259 = vst [vmem:[#allocation7 + $0x68] sm:$0xff] %v3220
    %3260 = vst [vmem:[#allocation7 + $0x70] sm:$0xff] %v3189
    %3261 = vst [vmem:[#allocation7 + $0x78] sm:$0xff] %v3221
    %3262 = vst [vmem:[#allocation7 + $0x80] sm:$0xff] %v3190
    %3263 = vst [vmem:[#allocation7 + $0x88] sm:$0xff] %v3222
    %3264 = vst [vmem:[#allocation7 + $0x90] sm:$0xff] %v3191
    %3265 = vst [vmem:[#allocation7 + $0x98] sm:$0xff] %v3223
    %3266 = vst [vmem:[#allocation7 + $0xa0] sm:$0xff] %v3192
    %3267 = vst [vmem:[#allocation7 + $0xa8] sm:$0xff] %v3224
    %3268 = vst [vmem:[#allocation7 + $0xb0] sm:$0xff] %v3193
    %3269 = vst [vmem:[#allocation7 + $0xb8] sm:$0xff] %v3225
    %3270 = vst [vmem:[#allocation7 + $0xc0] sm:$0xff] %v3194
    %3271 = vst [vmem:[#allocation7 + $0xc8] sm:$0xff] %v3226
    %3272 = vst [vmem:[#allocation7 + $0xd0] sm:$0xff] %v3195
    %3273 = vst [vmem:[#allocation7 + $0xd8] sm:$0xff] %v3227
    %3274 = vst [vmem:[#allocation7 + $0xe0] sm:$0xff] %v3196
    %3275 = vst [vmem:[#allocation7 + $0xe8] sm:$0xff] %v3228
    %3276 = vst [vmem:[#allocation7 + $0xf0] sm:$0xff] %v3197
    %3277 = vst [vmem:[#allocation7 + $0xf8] sm:$0xff] %v3229
    %3278 = vst [vmem:[#allocation7 + $0x100] sm:$0xff] %v3198
    %3279 = vst [vmem:[#allocation7 + $0x108] sm:$0xff] %v3230
    %3280 = vst [vmem:[#allocation7 + $0x110] sm:$0xff] %v3199
    %3281 = vst [vmem:[#allocation7 + $0x118] sm:$0xff] %v3231
    %3282 = vst [vmem:[#allocation7 + $0x120] sm:$0xff] %v3200
    %3283 = vst [vmem:[#allocation7 + $0x128] sm:$0xff] %v3232
    %3284 = vst [vmem:[#allocation7 + $0x130] sm:$0xff] %v3201
    %3285 = vst [vmem:[#allocation7 + $0x138] sm:$0xff] %v3233
    %3286 = vst [vmem:[#allocation7 + $0x140] sm:$0xff] %v3202
    %3287 = vst [vmem:[#allocation7 + $0x148] sm:$0xff] %v3234
    %3288 = vst [vmem:[#allocation7 + $0x150] sm:$0xff] %v3203
    %3289 = vst [vmem:[#allocation7 + $0x158] sm:$0xff] %v3235
    %3290 = vst [vmem:[#allocation7 + $0x160] sm:$0xff] %v3204
    %3291 = vst [vmem:[#allocation7 + $0x168] sm:$0xff] %v3236
    %3292 = vst [vmem:[#allocation7 + $0x170] sm:$0xff] %v3205
    %3293 = vst [vmem:[#allocation7 + $0x178] sm:$0xff] %v3237
    %3294 = vst [vmem:[#allocation7 + $0x180] sm:$0xff] %v3206
    %3295 = vst [vmem:[#allocation7 + $0x188] sm:$0xff] %v3238
    %3296 = vst [vmem:[#allocation7 + $0x190] sm:$0xff] %v3207
    %3297 = vst [vmem:[#allocation7 + $0x198] sm:$0xff] %v3239
    %3298 = vst [vmem:[#allocation7 + $0x1a0] sm:$0xff] %v3208
    %3299 = vst [vmem:[#allocation7 + $0x1a8] sm:$0xff] %v3240
    %3300 = vst [vmem:[#allocation7 + $0x1b0] sm:$0xff] %v3209
    %3301 = vst [vmem:[#allocation7 + $0x1b8] sm:$0xff] %v3241
    %3302 = vst [vmem:[#allocation7 + $0x1c0] sm:$0xff] %v3210
    %3303 = vst [vmem:[#allocation7 + $0x1c8] sm:$0xff] %v3242
    %3304 = vst [vmem:[#allocation7 + $0x1d0] sm:$0xff] %v3211
    %3305 = vst [vmem:[#allocation7 + $0x1d8] sm:$0xff] %v3243
    %3306 = vst [vmem:[#allocation7 + $0x1e0] sm:$0xff] %v3212
    %3307 = vst [vmem:[#allocation7 + $0x1e8] sm:$0xff] %v3244
    %3308 = vst [vmem:[#allocation7 + $0x1f0] sm:$0xff] %v3213
    %3309 = vst [vmem:[#allocation7 + $0x1f8] sm:$0xff] %v3245
    // Predicated region
    $region34: #{tpu_custom_call.1} parent=1 // pred_check
      _
    $region35: #{tpu_custom_call.1} parent=1 // pred_check_branch
      %3311 = sbr.rel (0) target = $region37
    $region36: #{tpu_custom_call.1} parent=1 // pred_region
      %s3313 = ssub.s32 8192, 8192
      %3314 = vsyncadd [#allocation4], %s3313
      %s3315 = sshll.u32 [#allocation7], 4
      %s3316 = int_to_ptr.vmem [resolvable:$true] %s3315
      %3321 = dma.vmem_to_hbm [thread:$0]  %s3316, 8192, %s6, [#allocation4], 256, 256, 16
    $region37: #{tpu_custom_call.1} parent=1 // pred_fallthru
      _
    // Predicated region
    $region38: #{tpu_custom_call.1} parent=1 // pred_check
      _
    $region39: #{tpu_custom_call.1} parent=1 // pred_check_branch
      %3323 = sbr.rel (0) target = $region41
    $region40: #{tpu_custom_call.1} parent=1 // pred_region
      %3324 = dma.done [#allocation4], 8192
    $region41: #{tpu_custom_call.1} parent=1 // pred_fallthru
      _
    %3325 = vsyncpa [#allocation3], 1
    %3326 = vsyncpa [#allocation6], 1
    %3327 = vsyncpa [#allocation4], 1

</llo_original>
